<compile_context>
chip_gen: v6e
topology: v6e:2x2x1
jax: 0.10.0
libtpu: 0.0.40
codegen_flags: <defaults>
</compile_context>

<pallas_src>
import jax
import jax.numpy as jnp
from jax.experimental import pallas as pl
from jax.experimental.pallas import tpu as pltpu


def _disc_kernel(x_ref, lbl_ref, emb_ref, w1_ref, w2_ref, w3_ref, w4_ref,
                 b_ref, o_ref):
    """Discriminator MLP on one batch tile.

    x_ref  : (TB, D_img)       f32   flattened image tile (cast to bf16 here)
    lbl_ref: (TB, 1)           int32 class labels
    emb_ref: (NCLS_PAD, 512)   bf16  projected embedding table (emb@W1_emb+b1)
    w1_ref : (D_img, 512)      bf16
    w2_ref : (512, 512)        bf16
    w3_ref : (512, 512)        bf16
    w4_ref : (1, 512)          f32   head weight row
    b_ref  : (3, 512)          f32   rows: b2, b3, [b4, 0, ...]
    o_ref  : (1, 1, TB)        f32   lane-dense output row for this tile
    """
    tb = lbl_ref.shape[0]
    ncls_pad = emb_ref.shape[0]

    def lrelu(h):
        return jnp.maximum(h, 0.2 * h)

    # Layer 1: img @ W1_img + one_hot(label) @ (emb @ W1_emb + b1)
    h = jnp.dot(x_ref[...].astype(jnp.bfloat16), w1_ref[...],
                preferred_element_type=jnp.float32)
    lane = jax.lax.broadcasted_iota(jnp.int32, (tb, ncls_pad), 1)
    onehot = (lane == lbl_ref[...]).astype(jnp.bfloat16)          # (TB, NCLS_PAD)
    h = h + jnp.dot(onehot, emb_ref[...], preferred_element_type=jnp.float32)
    h = lrelu(h)

    # Layer 2 (+ Dropout(0.4) -> identity, eval mode)
    h = jnp.dot(h.astype(jnp.bfloat16), w2_ref[...],
                preferred_element_type=jnp.float32)
    h = lrelu(h + b_ref[0:1, :])

    # Layer 3 (+ Dropout(0.4) -> identity, eval mode)
    h = jnp.dot(h.astype(jnp.bfloat16), w3_ref[...],
                preferred_element_type=jnp.float32)
    h = lrelu(h + b_ref[1:2, :])

    # Head 512 -> 1: VPU multiply + lane reduction, then a small relayout so
    # the store is lane-dense (unmasked) instead of a (TB, 1) masked column.
    o = jnp.sum(h * w4_ref[...], axis=-1, keepdims=True) + b_ref[2:3, 0:1]
    o_ref[...] = jnp.transpose(o).reshape(1, 1, -1).astype(o_ref.dtype)


def _pick_tiling(batch):
    """Pick a power-of-two batch tile TB (>= 8) and the padded batch size."""
    p_b = max(8, ((batch + 7) // 8) * 8)
    tb = 512
    while tb > p_b:
        tb //= 2
    # Keep >= 2 grid steps when the batch allows it (v7x has 2 TensorCores).
    if p_b // tb < 2 and tb > 8:
        tb //= 2
    p_b = ((p_b + tb - 1) // tb) * tb
    return tb, p_b


def discriminator_forward(img, labels, params):
    """img: (B, C, H, W) float32; labels: (B,) int32 -> (B, 1) float32."""
    B = img.shape[0]
    img_flat = img.reshape(B, -1)                 # f32 view, no cast pass
    d_img = img_flat.shape[1]
    n_classes = params["emb"].shape[0]

    # Tiny precompute: projected embedding table, padded to 128 rows, bf16.
    ncls_pad = ((n_classes + 127) // 128) * 128
    emb_table = (params["emb"] @ params["w1_emb"] + params["b1"]).astype(jnp.bfloat16)
    emb_table = jnp.pad(emb_table, ((0, ncls_pad - n_classes), (0, 0)))

    TB, pB = _pick_tiling(B)
    pad = pB - B
    if pad:
        img_flat = jnp.pad(img_flat, ((0, pad), (0, 0)))
        labels = jnp.pad(labels, (0, pad))
    labels2d = labels.astype(jnp.int32).reshape(pB, 1)

    # Stacked biases: row0=b2, row1=b3, row2=[b4, 0, ...]
    b_stack = jnp.concatenate(
        [params["b2"], params["b3"],
         jnp.pad(params["b4"], ((0, 0), (0, 511)))], axis=0)      # (3, 512) f32

    num_tiles = pB // TB
    out = pl.pallas_call(
        _disc_kernel,
        out_shape=jax.ShapeDtypeStruct((num_tiles, 1, TB), jnp.float32),
        grid=(num_tiles,),
        in_specs=[
            pl.BlockSpec((TB, d_img), lambda i: (i, 0)),        # image tile (f32)
            pl.BlockSpec((TB, 1), lambda i: (i, 0)),            # labels tile
            pl.BlockSpec((ncls_pad, 512), lambda i: (0, 0)),    # emb table (resident)
            pl.BlockSpec((d_img, 512), lambda i: (0, 0)),       # w1_img (resident)
            pl.BlockSpec((512, 512), lambda i: (0, 0)),         # w2 (resident)
            pl.BlockSpec((512, 512), lambda i: (0, 0)),         # w3 (resident)
            pl.BlockSpec((1, 512), lambda i: (0, 0)),           # w4 row (resident)
            pl.BlockSpec((3, 512), lambda i: (0, 0)),           # biases (resident)
        ],
        out_specs=pl.BlockSpec((1, 1, TB), lambda i: (i, 0, 0)),  # lane-dense row
        compiler_params=pltpu.CompilerParams(
            dimension_semantics=("parallel",)),
    )(
        img_flat, labels2d, emb_table,
        params["w1_img"], params["w2"], params["w3"], params["w4_row"],
        b_stack,
    )
    return out.reshape(pB, 1)[:B]


def init_params(key, n_classes, img_shape):
    d_img = 1
    for s in img_shape:
        d_img *= int(s)
    d_in = d_img + n_classes
    ks = jax.random.split(key, 9)

    def lin_w(k, fan_in, fan_out):
        lim = 1.0 / float(fan_in) ** 0.5
        return jax.random.uniform(k, (fan_in, fan_out), jnp.float32, -lim, lim)

    def lin_b(k, fan_in, fan_out):
        lim = 1.0 / float(fan_in) ** 0.5
        return jax.random.uniform(k, (1, fan_out), jnp.float32, -lim, lim)

    w1 = lin_w(ks[1], d_in, 512)                  # PyTorch cat order: [img, emb]
    return {
        "emb": jax.random.normal(ks[0], (n_classes, n_classes), jnp.float32),
        "w1_img": w1[:d_img].astype(jnp.bfloat16),   # (d_img, 512) bf16
        "w1_emb": w1[d_img:],                        # (n_classes, 512) f32
        "b1": lin_b(ks[5], d_in, 512),
        "w2": lin_w(ks[2], 512, 512).astype(jnp.bfloat16),
        "b2": lin_b(ks[6], 512, 512),
        "w3": lin_w(ks[3], 512, 512).astype(jnp.bfloat16),
        "b3": lin_b(ks[7], 512, 512),
        "w4_row": lin_w(ks[4], 512, 1).T,            # (1, 512) f32
        "b4": lin_b(ks[8], 512, 1),                  # (1, 1) f32
    }


def _reference(img, labels, p):
    """Pure-JAX reference mirroring the kernel's precision choices."""
    B = img.shape[0]
    n_classes = p["emb"].shape[0]
    x = img.reshape(B, -1).astype(jnp.bfloat16)
    table = (p["emb"] @ p["w1_emb"] + p["b1"]).astype(jnp.bfloat16)
    onehot = jax.nn.one_hot(labels, n_classes, dtype=jnp.bfloat16)
    lrelu = lambda h: jnp.maximum(h, 0.2 * h)
    h = (jnp.dot(x, p["w1_img"], preferred_element_type=jnp.float32)
         + jnp.dot(onehot, table, preferred_element_type=jnp.float32))
    h = lrelu(h)
    h = lrelu(jnp.dot(h.astype(jnp.bfloat16), p["w2"],
                      preferred_element_type=jnp.float32) + p["b2"])
    h = lrelu(jnp.dot(h.astype(jnp.bfloat16), p["w3"],
                      preferred_element_type=jnp.float32) + p["b3"])
    return jnp.sum(h * p["w4_row"], axis=-1, keepdims=True) + p["b4"]


if __name__ == "__main__":
    key = jax.random.PRNGKey(0)
    n_classes = 10
    img_shape = (1, 16, 16)        # (C, H, W) -> flattened dim 256
    params = init_params(jax.random.fold_in(key, 0), n_classes, img_shape)

    # B=2 exercises the single-tile path; B=40 exercises padding + a 3-step
    # grid (multi-TensorCore sharding path on v7x).
    for i, B in enumerate((2, 40)):
        k_img = jax.random.fold_in(key, 10 + i)
        k_lab = jax.random.fold_in(key, 20 + i)
        img = jax.random.normal(k_img, (B,) + img_shape, jnp.float32)
        labels = jax.random.randint(k_lab, (B,), 0, n_classes, jnp.int32)

        out = jax.block_until_ready(discriminator_forward(img, labels, params))
        ref = _reference(img, labels, params)

        assert out.shape == (B, 1), out.shape
        assert jnp.allclose(out, ref, atol=1e-2, rtol=1e-2), (out, ref)

    print("KERNEL_OK")
</pallas_src>

<mosaic_0001>
module attributes {stable_mosaic.version = 11 : i64} {
  func.func @_disc_kernel(%arg0: i32, %arg1: memref<8x256xf32, #tpu.memory_space<vmem>>, %arg2: memref<8x1xi32, #tpu.memory_space<vmem>>, %arg3: memref<128x512xbf16, #tpu.memory_space<vmem>>, %arg4: memref<256x512xbf16, #tpu.memory_space<vmem>>, %arg5: memref<512x512xbf16, #tpu.memory_space<vmem>>, %arg6: memref<512x512xbf16, #tpu.memory_space<vmem>>, %arg7: memref<1x512xf32, #tpu.memory_space<vmem>>, %arg8: memref<3x512xf32, #tpu.memory_space<vmem>>, %arg9: memref<1x1x8xf32, #tpu.memory_space<vmem>>) attributes {dimension_semantics = [#tpu.dimension_semantics<parallel>], iteration_bounds = array<i64: 1>, scalar_prefetch = 0 : i64, scratch_operands = 0 : i64, tpu.core_type = #tpu.core_type<tc>, window_params = [{transform_indices = @transform_0, window_bounds = array<i64: 8, 256>}, {transform_indices = @transform_1, window_bounds = array<i64: 8, 1>}, {pipeline_mode = #tpu.pipeline_mode<synchronous>, transform_indices = @transform_2, window_bounds = array<i64: 128, 512>}, {pipeline_mode = #tpu.pipeline_mode<synchronous>, transform_indices = @transform_3, window_bounds = array<i64: 256, 512>}, {pipeline_mode = #tpu.pipeline_mode<synchronous>, transform_indices = @transform_4, window_bounds = array<i64: 512, 512>}, {pipeline_mode = #tpu.pipeline_mode<synchronous>, transform_indices = @transform_5, window_bounds = array<i64: 512, 512>}, {pipeline_mode = #tpu.pipeline_mode<synchronous>, transform_indices = @transform_6, window_bounds = array<i64: 1, 512>}, {pipeline_mode = #tpu.pipeline_mode<synchronous>, transform_indices = @transform_7, window_bounds = array<i64: 3, 512>}, {transform_indices = @transform_8, window_bounds = array<i64: 1, 1, 8>}]} {
    %c0 = arith.constant 0 : index
    %c0_0 = arith.constant 0 : index
    %0 = vector.load %arg1[%c0, %c0_0] : memref<8x256xf32, #tpu.memory_space<vmem>>, vector<8x256xf32>
    %1 = arith.truncf %0 : vector<8x256xf32> to vector<8x256xbf16>
    %c0_1 = arith.constant 0 : index
    %c0_2 = arith.constant 0 : index
    %2 = vector.load %arg4[%c0_1, %c0_2] : memref<256x512xbf16, #tpu.memory_space<vmem>>, vector<256x512xbf16>
    %cst = arith.constant dense<0.000000e+00> : vector<8x512xf32>
    %3 = tpu.matmul %1, %2, %cst {dimension_numbers = #tpu.dot_dimension_numbers<[1], [0], [0], [1], [0, 0, 1, 1], [], []>} : vector<8x256xbf16>, vector<256x512xbf16>, vector<8x512xf32> -> vector<8x512xf32>
    %4 = tpu.iota {dimensions = array<i32: 1>} : vector<8x128xi32>
    %c0_3 = arith.constant 0 : index
    %c0_4 = arith.constant 0 : index
    %5 = vector.load %arg2[%c0_3, %c0_4] : memref<8x1xi32, #tpu.memory_space<vmem>>, vector<8x1xi32>
    %6 = vector.broadcast %5 : vector<8x1xi32> to vector<8x128xi32>
    %7 = arith.cmpi eq, %4, %6 : vector<8x128xi32>
    %8 = arith.extui %7 : vector<8x128xi1> to vector<8x128xi32>
    %9 = arith.sitofp %8 : vector<8x128xi32> to vector<8x128xf32>
    %10 = arith.truncf %9 : vector<8x128xf32> to vector<8x128xbf16>
    %c0_5 = arith.constant 0 : index
    %c0_6 = arith.constant 0 : index
    %11 = vector.load %arg3[%c0_5, %c0_6] : memref<128x512xbf16, #tpu.memory_space<vmem>>, vector<128x512xbf16>
    %cst_7 = arith.constant dense<0.000000e+00> : vector<8x512xf32>
    %12 = tpu.matmul %10, %11, %cst_7 {dimension_numbers = #tpu.dot_dimension_numbers<[1], [0], [0], [1], [0, 0, 1, 1], [], []>} : vector<8x128xbf16>, vector<128x512xbf16>, vector<8x512xf32> -> vector<8x512xf32>
    %13 = arith.addf %3, %12 : vector<8x512xf32>
    %cst_8 = arith.constant 2.000000e-01 : f32
    %14 = vector.broadcast %cst_8 : f32 to vector<8x512xf32>
    %15 = arith.mulf %14, %13 : vector<8x512xf32>
    %16 = arith.maximumf %13, %15 : vector<8x512xf32>
    %17 = arith.truncf %16 : vector<8x512xf32> to vector<8x512xbf16>
    %c0_9 = arith.constant 0 : index
    %c0_10 = arith.constant 0 : index
    %18 = vector.load %arg5[%c0_9, %c0_10] : memref<512x512xbf16, #tpu.memory_space<vmem>>, vector<512x512xbf16>
    %cst_11 = arith.constant dense<0.000000e+00> : vector<8x512xf32>
    %19 = tpu.matmul %17, %18, %cst_11 {dimension_numbers = #tpu.dot_dimension_numbers<[1], [0], [0], [1], [0, 0, 1, 1], [], []>} : vector<8x512xbf16>, vector<512x512xbf16>, vector<8x512xf32> -> vector<8x512xf32>
    %c0_12 = arith.constant 0 : index
    %c0_13 = arith.constant 0 : index
    %20 = vector.load %arg8[%c0_12, %c0_13] : memref<3x512xf32, #tpu.memory_space<vmem>>, vector<1x512xf32>
    %21 = vector.broadcast %20 : vector<1x512xf32> to vector<8x512xf32>
    %22 = arith.addf %19, %21 : vector<8x512xf32>
    %cst_14 = arith.constant 2.000000e-01 : f32
    %23 = vector.broadcast %cst_14 : f32 to vector<8x512xf32>
    %24 = arith.mulf %23, %22 : vector<8x512xf32>
    %25 = arith.maximumf %22, %24 : vector<8x512xf32>
    %26 = arith.truncf %25 : vector<8x512xf32> to vector<8x512xbf16>
    %c0_15 = arith.constant 0 : index
    %c0_16 = arith.constant 0 : index
    %27 = vector.load %arg6[%c0_15, %c0_16] : memref<512x512xbf16, #tpu.memory_space<vmem>>, vector<512x512xbf16>
    %cst_17 = arith.constant dense<0.000000e+00> : vector<8x512xf32>
    %28 = tpu.matmul %26, %27, %cst_17 {dimension_numbers = #tpu.dot_dimension_numbers<[1], [0], [0], [1], [0, 0, 1, 1], [], []>} : vector<8x512xbf16>, vector<512x512xbf16>, vector<8x512xf32> -> vector<8x512xf32>
    %c1 = arith.constant 1 : index
    %c0_18 = arith.constant 0 : index
    %29 = vector.load %arg8[%c1, %c0_18] : memref<3x512xf32, #tpu.memory_space<vmem>>, vector<1x512xf32>
    %30 = vector.broadcast %29 : vector<1x512xf32> to vector<8x512xf32>
    %31 = arith.addf %28, %30 : vector<8x512xf32>
    %cst_19 = arith.constant 2.000000e-01 : f32
    %32 = vector.broadcast %cst_19 : f32 to vector<8x512xf32>
    %33 = arith.mulf %32, %31 : vector<8x512xf32>
    %34 = arith.maximumf %31, %33 : vector<8x512xf32>
    %c0_20 = arith.constant 0 : index
    %c0_21 = arith.constant 0 : index
    %35 = vector.load %arg7[%c0_20, %c0_21] : memref<1x512xf32, #tpu.memory_space<vmem>>, vector<1x512xf32>
    %36 = vector.broadcast %35 : vector<1x512xf32> to vector<8x512xf32>
    %37 = arith.mulf %34, %36 : vector<8x512xf32>
    %cst_22 = arith.constant dense<0.000000e+00> : vector<8xf32>
    %38 = vector.multi_reduction <add>, %37, %cst_22 [1] : vector<8x512xf32> to vector<8xf32>
    %39 = vector.shape_cast %38 : vector<8xf32> to vector<8x1xf32>
    %c2 = arith.constant 2 : index
    %c0_23 = arith.constant 0 : index
    %40 = vector.load %arg8[%c2, %c0_23] : memref<3x512xf32, #tpu.memory_space<vmem>>, vector<1x1xf32>
    %41 = vector.broadcast %40 : vector<1x1xf32> to vector<8x1xf32>
    %42 = arith.addf %39, %41 : vector<8x1xf32>
    %43 = tpu.transpose %42, [1, 0] : vector<8x1xf32> -> vector<1x8xf32>
    %44 = vector.shape_cast %43 : vector<1x8xf32> to vector<1x1x8xf32>
    %c0_24 = arith.constant 0 : index
    %c0_25 = arith.constant 0 : index
    %c0_26 = arith.constant 0 : index
    %45 = vector.load %arg9[%c0_24, %c0_25, %c0_26] : memref<1x1x8xf32, #tpu.memory_space<vmem>>, vector<1x1x8xf32>
    tpu.vector_store %arg9[%c0_24, %c0_25, %c0_26], %44 {strides = array<i32>} : memref<1x1x8xf32, #tpu.memory_space<vmem>>, vector<1x1x8xf32>,
    return
  }
  func.func @transform_0(%arg0: i32) -> (i32, i32) {
    %c0_i32 = arith.constant 0 : i32
    %c0_i32_0 = arith.constant 0 : i32
    return %arg0, %c0_i32 : i32, i32
  }
  func.func @transform_1(%arg0: i32) -> (i32, i32) {
    %c0_i32 = arith.constant 0 : i32
    %c0_i32_0 = arith.constant 0 : i32
    return %arg0, %c0_i32 : i32, i32
  }
  func.func @transform_2(%arg0: i32) -> (i32, i32) {
    %c0_i32 = arith.constant 0 : i32
    %c0_i32_0 = arith.constant 0 : i32
    %c0_i32_1 = arith.constant 0 : i32
    return %c0_i32, %c0_i32_0 : i32, i32
  }
  func.func @transform_3(%arg0: i32) -> (i32, i32) {
    %c0_i32 = arith.constant 0 : i32
    %c0_i32_0 = arith.constant 0 : i32
    %c0_i32_1 = arith.constant 0 : i32
    return %c0_i32, %c0_i32_0 : i32, i32
  }
  func.func @transform_4(%arg0: i32) -> (i32, i32) {
    %c0_i32 = arith.constant 0 : i32
    %c0_i32_0 = arith.constant 0 : i32
    %c0_i32_1 = arith.constant 0 : i32
    return %c0_i32, %c0_i32_0 : i32, i32
  }
  func.func @transform_5(%arg0: i32) -> (i32, i32) {
    %c0_i32 = arith.constant 0 : i32
    %c0_i32_0 = arith.constant 0 : i32
    %c0_i32_1 = arith.constant 0 : i32
    return %c0_i32, %c0_i32_0 : i32, i32
  }
  func.func @transform_6(%arg0: i32) -> (i32, i32) {
    %c0_i32 = arith.constant 0 : i32
    %c0_i32_0 = arith.constant 0 : i32
    %c0_i32_1 = arith.constant 0 : i32
    return %c0_i32, %c0_i32_0 : i32, i32
  }
  func.func @transform_7(%arg0: i32) -> (i32, i32) {
    %c0_i32 = arith.constant 0 : i32
    %c0_i32_0 = arith.constant 0 : i32
    %c0_i32_1 = arith.constant 0 : i32
    return %c0_i32, %c0_i32_0 : i32, i32
  }
  func.func @transform_8(%arg0: i32) -> (i32, i32, i32) {
    %c0_i32 = arith.constant 0 : i32
    %c0_i32_0 = arith.constant 0 : i32
    %c0_i32_1 = arith.constant 0 : i32
    return %arg0, %c0_i32, %c0_i32_0 : i32, i32, i32
  }
}

</mosaic_0001>

<llo_original>
// kernel: tpu_custom_call.1
$region0: #{tpu_custom_call.1}
  #allocation0 [shape = 'u32[]', space=smem, size = 0x4, offset = 0x4, fixed_abs, tag = 'smem constant byte address 0x4 - core index']
  #allocation1 [shape = 'u32[144,128]{1,0:T(1,128)}', space=vmem, size = 0x12000, scoped, tag = 'internal scratch']
  %s0 = inlined_call_operand.hbm [shape: f32[8,256], index: 0, kind: input, shape index: {}]
  %s1 = inlined_call_operand.vmem [shape: s32[8,1], index: 1, kind: input, shape index: {}]
  %s2 = inlined_call_operand.hbm [shape: bf16[128,512], index: 2, kind: input, shape index: {}]
  %s3 = inlined_call_operand.hbm [shape: bf16[256,512], index: 3, kind: input, shape index: {}]
  %s4 = inlined_call_operand.hbm [shape: bf16[512,512], index: 4, kind: input, shape index: {}]
  %s5 = inlined_call_operand.hbm [shape: bf16[512,512], index: 5, kind: input, shape index: {}]
  %s6 = inlined_call_operand.vmem [shape: f32[1,512], index: 6, kind: input, shape index: {}]
  %s7 = inlined_call_operand.vmem [shape: f32[3,512], index: 7, kind: input, shape index: {}]
  %s8 = inlined_call_operand.hbm [shape: f32[1,1,8], index: 8, kind: output, shape index: {}]
  %s9 = sld [smem:[#allocation0]]
  $region62: #{tpu_custom_call.1} parent=0
    _
  %s11 = ssub.s32 1, %s9
  %s12 = scalar_select 0, %s11, %s9
  $region1: #{tpu_custom_call.1} parent=0
    #allocation2 [shape = 'u8[8192]{0}', space=vmem, size = 0x2000, scoped, tag = 'input window, operand 0, single buffered']
    #allocation3 [shape = 's32[1]{0}', space=sflag, size = 0x4, scoped, tag = 'scoped memory for tpu_custom_call.1']
    #allocation4 [shape = 's32[1]{0}', space=sflag, size = 0x4, scoped, tag = 'scoped memory for tpu_custom_call.1']
    #allocation5 [shape = 'u8[131072]{0}', space=vmem, size = 0x20000, scoped, tag = 'input window, operand 2, single buffered']
    #allocation6 [shape = 's32[1]{0}', space=sflag, size = 0x4, scoped, tag = 'scoped memory for tpu_custom_call.1']
    #allocation7 [shape = 'u8[262144]{0}', space=vmem, size = 0x40000, scoped, tag = 'input window, operand 3, single buffered']
    #allocation8 [shape = 'u8[524288]{0}', space=vmem, size = 0x80000, scoped, tag = 'input window, operand 4, single buffered']
    #allocation9 [shape = 's32[1]{0}', space=sflag, size = 0x4, scoped, tag = 'scoped memory for tpu_custom_call.1']
    #allocation10 [shape = 'u8[524288]{0}', space=vmem, size = 0x80000, scoped, tag = 'input window, operand 5, single buffered']
    #allocation11 [shape = 'u8[512]{0}', space=vmem, size = 0x400, scoped, tag = 'output window, operand 0, single buffered']
    %13 = vsyncpa [#allocation3], 0
    %14 = vsyncpa [#allocation6], 0
    %15 = vsyncpa [#allocation9], 0
    %16 = vsyncpa [#allocation4], 0
    // Predicated region
    $region2: #{tpu_custom_call.1} parent=1 // pred_check
      _
    $region3: #{tpu_custom_call.1} parent=1 // pred_check_branch
      %18 = sbr.rel (0) target = $region5
    $region4: #{tpu_custom_call.1} parent=1 // pred_region
      %s20 = ssub.s32 256, 256
      %21 = vsyncadd [#allocation3], %s20
      %s23 = sshll.u32 [#allocation2], 4
      %s24 = int_to_ptr.vmem [resolvable:$true] %s23
      %26 = dma.hbm_to_vmem [thread:$0]  %s0, 256, %s24, [#allocation3]
    $region5: #{tpu_custom_call.1} parent=1 // pred_fallthru
      _
    // Predicated region
    $region6: #{tpu_custom_call.1} parent=1 // pred_check
      _
    $region7: #{tpu_custom_call.1} parent=1 // pred_check_branch
      %28 = sbr.rel (0) target = $region9
    $region8: #{tpu_custom_call.1} parent=1 // pred_region
      _
    $region9: #{tpu_custom_call.1} parent=1 // pred_fallthru
      _
    // Predicated region
    $region10: #{tpu_custom_call.1} parent=1 // pred_check
      _
    $region11: #{tpu_custom_call.1} parent=1 // pred_check_branch
      %30 = sbr.rel (0) target = $region13
    $region12: #{tpu_custom_call.1} parent=1 // pred_region
      %s32 = ssub.s32 4096, 4096
      %33 = vsyncadd [#allocation6], %s32
      %s34 = sshll.u32 [#allocation5], 4
      %s35 = int_to_ptr.vmem [resolvable:$true] %s34
      %40 = dma.hbm_to_vmem [thread:$0]  %s2, 4096, %s35, [#allocation6], 256, 256, 16
    $region13: #{tpu_custom_call.1} parent=1 // pred_fallthru
      _
    // Predicated region
    $region14: #{tpu_custom_call.1} parent=1 // pred_check
      _
    $region15: #{tpu_custom_call.1} parent=1 // pred_check_branch
      %42 = sbr.rel (0) target = $region17
    $region16: #{tpu_custom_call.1} parent=1 // pred_region
      %s44 = ssub.s32 8192, 8192
      %45 = vsyncadd [#allocation6], %s44
      %s46 = sshll.u32 [#allocation7], 4
      %s47 = int_to_ptr.vmem [resolvable:$true] %s46
      %52 = dma.hbm_to_vmem [thread:$0]  %s3, 8192, %s47, [#allocation6], 256, 256, 16
    $region17: #{tpu_custom_call.1} parent=1 // pred_fallthru
      _
    // Predicated region
    $region18: #{tpu_custom_call.1} parent=1 // pred_check
      _
    $region19: #{tpu_custom_call.1} parent=1 // pred_check_branch
      %54 = sbr.rel (0) target = $region21
    $region20: #{tpu_custom_call.1} parent=1 // pred_region
      %s56 = ssub.s32 16384, 16384
      %57 = vsyncadd [#allocation9], %s56
      %s58 = sshll.u32 [#allocation8], 4
      %s59 = int_to_ptr.vmem [resolvable:$true] %s58
      %64 = dma.hbm_to_vmem [thread:$0]  %s4, 16384, %s59, [#allocation9], 256, 256, 16
    $region21: #{tpu_custom_call.1} parent=1 // pred_fallthru
      _
    // Predicated region
    $region22: #{tpu_custom_call.1} parent=1 // pred_check
      _
    $region23: #{tpu_custom_call.1} parent=1 // pred_check_branch
      %66 = sbr.rel (0) target = $region25
    $region24: #{tpu_custom_call.1} parent=1 // pred_region
      %s68 = ssub.s32 16384, 16384
      %69 = vsyncadd [#allocation9], %s68
      %s70 = sshll.u32 [#allocation10], 4
      %s71 = int_to_ptr.vmem [resolvable:$true] %s70
      %76 = dma.hbm_to_vmem [thread:$0]  %s5, 16384, %s71, [#allocation9], 256, 256, 16
    $region25: #{tpu_custom_call.1} parent=1 // pred_fallthru
      _
    // Predicated region
    $region26: #{tpu_custom_call.1} parent=1 // pred_check
      _
    $region27: #{tpu_custom_call.1} parent=1 // pred_check_branch
      %78 = sbr.rel (0) target = $region29
    $region28: #{tpu_custom_call.1} parent=1 // pred_region
      _
    $region29: #{tpu_custom_call.1} parent=1 // pred_fallthru
      _
    // Predicated region
    $region30: #{tpu_custom_call.1} parent=1 // pred_check
      _
    $region31: #{tpu_custom_call.1} parent=1 // pred_check_branch
      %80 = sbr.rel (0) target = $region33
    $region32: #{tpu_custom_call.1} parent=1 // pred_region
      _
    $region33: #{tpu_custom_call.1} parent=1 // pred_fallthru
      _
    // Predicated region
    $region34: #{tpu_custom_call.1} parent=1 // pred_check
      _
    $region35: #{tpu_custom_call.1} parent=1 // pred_check_branch
      %82 = sbr.rel (0) target = $region37
    $region36: #{tpu_custom_call.1} parent=1 // pred_region
      %83 = dma.done [#allocation3], 256
    $region37: #{tpu_custom_call.1} parent=1 // pred_fallthru
      _
    // Predicated region
    $region38: #{tpu_custom_call.1} parent=1 // pred_check
      _
    $region39: #{tpu_custom_call.1} parent=1 // pred_check_branch
      %85 = sbr.rel (0) target = $region41
    $region40: #{tpu_custom_call.1} parent=1 // pred_region
      %86 = dma.done [#allocation6], 4096
    $region41: #{tpu_custom_call.1} parent=1 // pred_fallthru
      _
    // Predicated region
    $region42: #{tpu_custom_call.1} parent=1 // pred_check
      _
    $region43: #{tpu_custom_call.1} parent=1 // pred_check_branch
      %88 = sbr.rel (0) target = $region45
    $region44: #{tpu_custom_call.1} parent=1 // pred_region
      %89 = dma.done [#allocation6], 8192
    $region45: #{tpu_custom_call.1} parent=1 // pred_fallthru
      _
    // Predicated region
    $region46: #{tpu_custom_call.1} parent=1 // pred_check
      _
    $region47: #{tpu_custom_call.1} parent=1 // pred_check_branch
      %91 = sbr.rel (0) target = $region49
    $region48: #{tpu_custom_call.1} parent=1 // pred_region
      %92 = dma.done [#allocation9], 16384
    $region49: #{tpu_custom_call.1} parent=1 // pred_fallthru
      _
    // Predicated region
    $region50: #{tpu_custom_call.1} parent=1 // pred_check
      _
    $region51: #{tpu_custom_call.1} parent=1 // pred_check_branch
      %94 = sbr.rel (0) target = $region53
    $region52: #{tpu_custom_call.1} parent=1 // pred_region
      %95 = dma.done [#allocation9], 16384
    $region53: #{tpu_custom_call.1} parent=1 // pred_fallthru
      _
    %v97 = vld [vmem:[#allocation2] sm:$0xff]
    %v98 = vld [vmem:[#allocation2 + $0x8] sm:$0xff]
    %v99 = vpack.c.bf16 %v97, %v97
    %v100 = vpack.c.bf16 %v98, %v98
    %v101 = vld [vmem:[#allocation7] sm:$0xff]
    %v102 = vld [vmem:[#allocation7 + $0x8] sm:$0xff]
    %v103 = vld [vmem:[#allocation7 + $0x10] sm:$0xff]
    %v104 = vld [vmem:[#allocation7 + $0x18] sm:$0xff]
    %v105 = vld [vmem:[#allocation7 + $0x20] sm:$0xff]
    %v106 = vld [vmem:[#allocation7 + $0x28] sm:$0xff]
    %v107 = vld [vmem:[#allocation7 + $0x30] sm:$0xff]
    %v108 = vld [vmem:[#allocation7 + $0x38] sm:$0xff]
    %v109 = vld [vmem:[#allocation7 + $0x40] sm:$0xff]
    %v110 = vld [vmem:[#allocation7 + $0x48] sm:$0xff]
    %v111 = vld [vmem:[#allocation7 + $0x50] sm:$0xff]
    %v112 = vld [vmem:[#allocation7 + $0x58] sm:$0xff]
    %v113 = vld [vmem:[#allocation7 + $0x60] sm:$0xff]
    %v114 = vld [vmem:[#allocation7 + $0x68] sm:$0xff]
    %v115 = vld [vmem:[#allocation7 + $0x70] sm:$0xff]
    %v116 = vld [vmem:[#allocation7 + $0x78] sm:$0xff]
    %v117 = vld [vmem:[#allocation7 + $0x80] sm:$0xff]
    %v118 = vld [vmem:[#allocation7 + $0x88] sm:$0xff]
    %v119 = vld [vmem:[#allocation7 + $0x90] sm:$0xff]
    %v120 = vld [vmem:[#allocation7 + $0x98] sm:$0xff]
    %v121 = vld [vmem:[#allocation7 + $0xa0] sm:$0xff]
    %v122 = vld [vmem:[#allocation7 + $0xa8] sm:$0xff]
    %v123 = vld [vmem:[#allocation7 + $0xb0] sm:$0xff]
    %v124 = vld [vmem:[#allocation7 + $0xb8] sm:$0xff]
    %v125 = vld [vmem:[#allocation7 + $0xc0] sm:$0xff]
    %v126 = vld [vmem:[#allocation7 + $0xc8] sm:$0xff]
    %v127 = vld [vmem:[#allocation7 + $0xd0] sm:$0xff]
    %v128 = vld [vmem:[#allocation7 + $0xd8] sm:$0xff]
    %v129 = vld [vmem:[#allocation7 + $0xe0] sm:$0xff]
    %v130 = vld [vmem:[#allocation7 + $0xe8] sm:$0xff]
    %v131 = vld [vmem:[#allocation7 + $0xf0] sm:$0xff]
    %v132 = vld [vmem:[#allocation7 + $0xf8] sm:$0xff]
    %v133 = vld [vmem:[#allocation7 + $0x100] sm:$0xff]
    %v134 = vld [vmem:[#allocation7 + $0x108] sm:$0xff]
    %v135 = vld [vmem:[#allocation7 + $0x110] sm:$0xff]
    %v136 = vld [vmem:[#allocation7 + $0x118] sm:$0xff]
    %v137 = vld [vmem:[#allocation7 + $0x120] sm:$0xff]
    %v138 = vld [vmem:[#allocation7 + $0x128] sm:$0xff]
    %v139 = vld [vmem:[#allocation7 + $0x130] sm:$0xff]
    %v140 = vld [vmem:[#allocation7 + $0x138] sm:$0xff]
    %v141 = vld [vmem:[#allocation7 + $0x140] sm:$0xff]
    %v142 = vld [vmem:[#allocation7 + $0x148] sm:$0xff]
    %v143 = vld [vmem:[#allocation7 + $0x150] sm:$0xff]
    %v144 = vld [vmem:[#allocation7 + $0x158] sm:$0xff]
    %v145 = vld [vmem:[#allocation7 + $0x160] sm:$0xff]
    %v146 = vld [vmem:[#allocation7 + $0x168] sm:$0xff]
    %v147 = vld [vmem:[#allocation7 + $0x170] sm:$0xff]
    %v148 = vld [vmem:[#allocation7 + $0x178] sm:$0xff]
    %v149 = vld [vmem:[#allocation7 + $0x180] sm:$0xff]
    %v150 = vld [vmem:[#allocation7 + $0x188] sm:$0xff]
    %v151 = vld [vmem:[#allocation7 + $0x190] sm:$0xff]
    %v152 = vld [vmem:[#allocation7 + $0x198] sm:$0xff]
    %v153 = vld [vmem:[#allocation7 + $0x1a0] sm:$0xff]
    %v154 = vld [vmem:[#allocation7 + $0x1a8] sm:$0xff]
    %v155 = vld [vmem:[#allocation7 + $0x1b0] sm:$0xff]
    %v156 = vld [vmem:[#allocation7 + $0x1b8] sm:$0xff]
    %v157 = vld [vmem:[#allocation7 + $0x1c0] sm:$0xff]
    %v158 = vld [vmem:[#allocation7 + $0x1c8] sm:$0xff]
    %v159 = vld [vmem:[#allocation7 + $0x1d0] sm:$0xff]
    %v160 = vld [vmem:[#allocation7 + $0x1d8] sm:$0xff]
    %v161 = vld [vmem:[#allocation7 + $0x1e0] sm:$0xff]
    %v162 = vld [vmem:[#allocation7 + $0x1e8] sm:$0xff]
    %v163 = vld [vmem:[#allocation7 + $0x1f0] sm:$0xff]
    %v164 = vld [vmem:[#allocation7 + $0x1f8] sm:$0xff]
    %v165 = vlaneseq
    %v166 = vand.u32 %v165, 127
    %v167 = vld [vmem:[%s1] sm:$0xff]
    %168 = vset.pattern.permute.xlu0 0
    %169 = vperm.xlu0 %168, %v167
    %v170 = vpop.permute.xlu0 %169
    %vm171 = vcmp.eq.s32.totalorder %v166, %v170
    %v172 = vsel %vm171, 1, 0
    %v173 = vcvt.s32.f32 %v172
    %v174 = vpack.c.bf16 %v173, %v173
    %v175 = vld [vmem:[#allocation5] sm:$0xff]
    %v176 = vld [vmem:[#allocation5 + $0x8] sm:$0xff]
    %v177 = vld [vmem:[#allocation5 + $0x10] sm:$0xff]
    %v178 = vld [vmem:[#allocation5 + $0x18] sm:$0xff]
    %v179 = vld [vmem:[#allocation5 + $0x20] sm:$0xff]
    %v180 = vld [vmem:[#allocation5 + $0x28] sm:$0xff]
    %v181 = vld [vmem:[#allocation5 + $0x30] sm:$0xff]
    %v182 = vld [vmem:[#allocation5 + $0x38] sm:$0xff]
    %v183 = vld [vmem:[#allocation5 + $0x40] sm:$0xff]
    %v184 = vld [vmem:[#allocation5 + $0x48] sm:$0xff]
    %v185 = vld [vmem:[#allocation5 + $0x50] sm:$0xff]
    %v186 = vld [vmem:[#allocation5 + $0x58] sm:$0xff]
    %v187 = vld [vmem:[#allocation5 + $0x60] sm:$0xff]
    %v188 = vld [vmem:[#allocation5 + $0x68] sm:$0xff]
    %v189 = vld [vmem:[#allocation5 + $0x70] sm:$0xff]
    %v190 = vld [vmem:[#allocation5 + $0x78] sm:$0xff]
    %v191 = vld [vmem:[#allocation5 + $0x80] sm:$0xff]
    %v192 = vld [vmem:[#allocation5 + $0x88] sm:$0xff]
    %v193 = vld [vmem:[#allocation5 + $0x90] sm:$0xff]
    %v194 = vld [vmem:[#allocation5 + $0x98] sm:$0xff]
    %v195 = vld [vmem:[#allocation5 + $0xa0] sm:$0xff]
    %v196 = vld [vmem:[#allocation5 + $0xa8] sm:$0xff]
    %v197 = vld [vmem:[#allocation5 + $0xb0] sm:$0xff]
    %v198 = vld [vmem:[#allocation5 + $0xb8] sm:$0xff]
    %v199 = vld [vmem:[#allocation5 + $0xc0] sm:$0xff]
    %v200 = vld [vmem:[#allocation5 + $0xc8] sm:$0xff]
    %v201 = vld [vmem:[#allocation5 + $0xd0] sm:$0xff]
    %v202 = vld [vmem:[#allocation5 + $0xd8] sm:$0xff]
    %v203 = vld [vmem:[#allocation5 + $0xe0] sm:$0xff]
    %v204 = vld [vmem:[#allocation5 + $0xe8] sm:$0xff]
    %v205 = vld [vmem:[#allocation5 + $0xf0] sm:$0xff]
    %v206 = vld [vmem:[#allocation5 + $0xf8] sm:$0xff]
    %v239 = vunpack.c.l.b16 %v175
    %v240 = vunpack.c.h.b16 %v175
    %v241 = vunpack.c.l.b16 %v176
    %v242 = vunpack.c.h.b16 %v176
    %v243 = vunpack.c.l.b16 %v177
    %v244 = vunpack.c.h.b16 %v177
    %v245 = vunpack.c.l.b16 %v178
    %v246 = vunpack.c.h.b16 %v178
    %v247 = vunpack.c.l.b16 %v179
    %v248 = vunpack.c.h.b16 %v179
    %v249 = vunpack.c.l.b16 %v180
    %v250 = vunpack.c.h.b16 %v180
    %v251 = vunpack.c.l.b16 %v181
    %v252 = vunpack.c.h.b16 %v181
    %v253 = vunpack.c.l.b16 %v182
    %v254 = vunpack.c.h.b16 %v182
    %v255 = vunpack.c.l.b16 %v183
    %v256 = vunpack.c.h.b16 %v183
    %v257 = vunpack.c.l.b16 %v184
    %v258 = vunpack.c.h.b16 %v184
    %v259 = vunpack.c.l.b16 %v185
    %v260 = vunpack.c.h.b16 %v185
    %v261 = vunpack.c.l.b16 %v186
    %v262 = vunpack.c.h.b16 %v186
    %v263 = vunpack.c.l.b16 %v187
    %v264 = vunpack.c.h.b16 %v187
    %v265 = vunpack.c.l.b16 %v188
    %v266 = vunpack.c.h.b16 %v188
    %v267 = vunpack.c.l.b16 %v189
    %v268 = vunpack.c.h.b16 %v189
    %v269 = vunpack.c.l.b16 %v190
    %v270 = vunpack.c.h.b16 %v190
    %v271 = vunpack.c.l.b16 %v191
    %v272 = vunpack.c.h.b16 %v191
    %v273 = vunpack.c.l.b16 %v192
    %v274 = vunpack.c.h.b16 %v192
    %v275 = vunpack.c.l.b16 %v193
    %v276 = vunpack.c.h.b16 %v193
    %v277 = vunpack.c.l.b16 %v194
    %v278 = vunpack.c.h.b16 %v194
    %v279 = vunpack.c.l.b16 %v195
    %v280 = vunpack.c.h.b16 %v195
    %v281 = vunpack.c.l.b16 %v196
    %v282 = vunpack.c.h.b16 %v196
    %v283 = vunpack.c.l.b16 %v197
    %v284 = vunpack.c.h.b16 %v197
    %v285 = vunpack.c.l.b16 %v198
    %v286 = vunpack.c.h.b16 %v198
    %v287 = vunpack.c.l.b16 %v199
    %v288 = vunpack.c.h.b16 %v199
    %v289 = vunpack.c.l.b16 %v200
    %v290 = vunpack.c.h.b16 %v200
    %v291 = vunpack.c.l.b16 %v201
    %v292 = vunpack.c.h.b16 %v201
    %v293 = vunpack.c.l.b16 %v202
    %v294 = vunpack.c.h.b16 %v202
    %v295 = vunpack.c.l.b16 %v203
    %v296 = vunpack.c.h.b16 %v203
    %v297 = vunpack.c.l.b16 %v204
    %v298 = vunpack.c.h.b16 %v204
    %v299 = vunpack.c.l.b16 %v205
    %v300 = vunpack.c.h.b16 %v205
    %v301 = vunpack.c.l.b16 %v206
    %v302 = vunpack.c.h.b16 %v206
    %v303 = vpack.c.b16 %v243, %v239
    %v304 = vpack.c.b16 %v244, %v240
    %v305 = vpack.c.b16 %v245, %v241
    %v306 = vpack.c.b16 %v246, %v242
    %v307 = vpack.c.b16 %v251, %v247
    %v308 = vpack.c.b16 %v252, %v248
    %v309 = vpack.c.b16 %v253, %v249
    %v310 = vpack.c.b16 %v254, %v250
    %v311 = vpack.c.b16 %v259, %v255
    %v312 = vpack.c.b16 %v260, %v256
    %v313 = vpack.c.b16 %v261, %v257
    %v314 = vpack.c.b16 %v262, %v258
    %v315 = vpack.c.b16 %v267, %v263
    %v316 = vpack.c.b16 %v268, %v264
    %v317 = vpack.c.b16 %v269, %v265
    %v318 = vpack.c.b16 %v270, %v266
    %v319 = vpack.c.b16 %v275, %v271
    %v320 = vpack.c.b16 %v276, %v272
    %v321 = vpack.c.b16 %v277, %v273
    %v322 = vpack.c.b16 %v278, %v274
    %v323 = vpack.c.b16 %v283, %v279
    %v324 = vpack.c.b16 %v284, %v280
    %v325 = vpack.c.b16 %v285, %v281
    %v326 = vpack.c.b16 %v286, %v282
    %v327 = vpack.c.b16 %v291, %v287
    %v328 = vpack.c.b16 %v292, %v288
    %v329 = vpack.c.b16 %v293, %v289
    %v330 = vpack.c.b16 %v294, %v290
    %v331 = vpack.c.b16 %v299, %v295
    %v332 = vpack.c.b16 %v300, %v296
    %v333 = vpack.c.b16 %v301, %v297
    %v334 = vpack.c.b16 %v302, %v298
    %367 = vmatprep.subr.bf16.mxu0 %v332
    %368 = vmatpush1.bf16.msra.mxu0 %v331
    %369 = vmatprep.subr.bf16.mxu0 %v328
    %370 = vmatpush1.bf16.msra.mxu0 %v327
    %371 = vmatprep.subr.bf16.mxu0 %v324
    %372 = vmatpush1.bf16.msra.mxu0 %v323
    %373 = vmatprep.subr.bf16.mxu0 %v320
    %374 = vmatpush1.bf16.msra.mxu0 %v319
    %375 = vmatprep.subr.bf16.mxu0 %v316
    %376 = vmatpush1.bf16.msra.mxu0 %v315
    %377 = vmatprep.subr.bf16.mxu0 %v312
    %378 = vmatpush1.bf16.msra.mxu0 %v311
    %379 = vmatprep.subr.bf16.mxu0 %v308
    %380 = vmatpush1.bf16.msra.mxu0 %v307
    %381 = vmatprep.subr.bf16.mxu0 %v304
    %382 = vmatpush1.bf16.msra.mxu0 %v303
    %383 = vmatprep.subr.bf16.mxu0 0
    %384 = vmatpush2.bf16.msra.mxu0 0
    %385 = vmatprep.subr.bf16.mxu0 0
    %386 = vmatpush2.bf16.msra.mxu0 0
    %387 = vmatprep.subr.bf16.mxu0 0
    %388 = vmatpush2.bf16.msra.mxu0 0
    %389 = vmatprep.subr.bf16.mxu0 0
    %390 = vmatpush2.bf16.msra.mxu0 0
    %391 = vmatprep.subr.bf16.mxu0 0
    %392 = vmatpush2.bf16.msra.mxu0 0
    %393 = vmatprep.subr.bf16.mxu0 0
    %394 = vmatpush2.bf16.msra.mxu0 0
    %395 = vmatprep.subr.bf16.mxu0 0
    %396 = vmatpush2.bf16.msra.mxu0 0
    %397 = vmatprep.subr.bf16.mxu0 0
    %398 = vmatpush2.bf16.msra.mxu0 0
    %399 = vmatprep.mubr.bf16.mxu0 0
    %400 = vmatmul.mubr.bf16.gmra.mxu0 %v174
    %v401 = vpop.f32.mrf.mxu0
    %v402 = vadd.f32 0.0, %v401
    %v403 = vpop.f32.mrf.mxu0
    %v404 = vadd.f32 0.0, %v403
    %v405 = vpop.f32.mrf.mxu0
    %v406 = vpop.f32.mrf.mxu0
    %407 = vdwg.mxu0
    %408 = vmatprep.subr.bf16.mxu0 %v334
    %409 = vmatpush1.bf16.msra.mxu0 %v333
    %410 = vmatprep.subr.bf16.mxu0 %v330
    %411 = vmatpush1.bf16.msra.mxu0 %v329
    %412 = vmatprep.subr.bf16.mxu0 %v326
    %413 = vmatpush1.bf16.msra.mxu0 %v325
    %414 = vmatprep.subr.bf16.mxu0 %v322
    %415 = vmatpush1.bf16.msra.mxu0 %v321
    %416 = vmatprep.subr.bf16.mxu0 %v318
    %417 = vmatpush1.bf16.msra.mxu0 %v317
    %418 = vmatprep.subr.bf16.mxu0 %v314
    %419 = vmatpush1.bf16.msra.mxu0 %v313
    %420 = vmatprep.subr.bf16.mxu0 %v310
    %421 = vmatpush1.bf16.msra.mxu0 %v309
    %422 = vmatprep.subr.bf16.mxu0 %v306
    %423 = vmatpush1.bf16.msra.mxu0 %v305
    %424 = vmatprep.subr.bf16.mxu0 0
    %425 = vmatpush2.bf16.msra.mxu0 0
    %426 = vmatprep.subr.bf16.mxu0 0
    %427 = vmatpush2.bf16.msra.mxu0 0
    %428 = vmatprep.subr.bf16.mxu0 0
    %429 = vmatpush2.bf16.msra.mxu0 0
    %430 = vmatprep.subr.bf16.mxu0 0
    %431 = vmatpush2.bf16.msra.mxu0 0
    %432 = vmatprep.subr.bf16.mxu0 0
    %433 = vmatpush2.bf16.msra.mxu0 0
    %434 = vmatprep.subr.bf16.mxu0 0
    %435 = vmatpush2.bf16.msra.mxu0 0
    %436 = vmatprep.subr.bf16.mxu0 0
    %437 = vmatpush2.bf16.msra.mxu0 0
    %438 = vmatprep.subr.bf16.mxu0 0
    %439 = vmatpush2.bf16.msra.mxu0 0
    %440 = vmatprep.mubr.bf16.mxu0 0
    %441 = vmatmul.mubr.bf16.gmra.mxu0 %v174
    %v442 = vpop.f32.mrf.mxu0
    %v443 = vadd.f32 0.0, %v442
    %v444 = vpop.f32.mrf.mxu0
    %v445 = vadd.f32 0.0, %v444
    %v446 = vpop.f32.mrf.mxu0
    %v447 = vpop.f32.mrf.mxu0
    %448 = vdwg.mxu0
    %v513 = vunpack.c.l.b16 %v101
    %v514 = vunpack.c.h.b16 %v101
    %v515 = vunpack.c.l.b16 %v102
    %v516 = vunpack.c.h.b16 %v102
    %v517 = vunpack.c.l.b16 %v103
    %v518 = vunpack.c.h.b16 %v103
    %v519 = vunpack.c.l.b16 %v104
    %v520 = vunpack.c.h.b16 %v104
    %v521 = vunpack.c.l.b16 %v105
    %v522 = vunpack.c.h.b16 %v105
    %v523 = vunpack.c.l.b16 %v106
    %v524 = vunpack.c.h.b16 %v106
    %v525 = vunpack.c.l.b16 %v107
    %v526 = vunpack.c.h.b16 %v107
    %v527 = vunpack.c.l.b16 %v108
    %v528 = vunpack.c.h.b16 %v108
    %v529 = vunpack.c.l.b16 %v109
    %v530 = vunpack.c.h.b16 %v109
    %v531 = vunpack.c.l.b16 %v110
    %v532 = vunpack.c.h.b16 %v110
    %v533 = vunpack.c.l.b16 %v111
    %v534 = vunpack.c.h.b16 %v111
    %v535 = vunpack.c.l.b16 %v112
    %v536 = vunpack.c.h.b16 %v112
    %v537 = vunpack.c.l.b16 %v113
    %v538 = vunpack.c.h.b16 %v113
    %v539 = vunpack.c.l.b16 %v114
    %v540 = vunpack.c.h.b16 %v114
    %v541 = vunpack.c.l.b16 %v115
    %v542 = vunpack.c.h.b16 %v115
    %v543 = vunpack.c.l.b16 %v116
    %v544 = vunpack.c.h.b16 %v116
    %v545 = vunpack.c.l.b16 %v117
    %v546 = vunpack.c.h.b16 %v117
    %v547 = vunpack.c.l.b16 %v118
    %v548 = vunpack.c.h.b16 %v118
    %v549 = vunpack.c.l.b16 %v119
    %v550 = vunpack.c.h.b16 %v119
    %v551 = vunpack.c.l.b16 %v120
    %v552 = vunpack.c.h.b16 %v120
    %v553 = vunpack.c.l.b16 %v121
    %v554 = vunpack.c.h.b16 %v121
    %v555 = vunpack.c.l.b16 %v122
    %v556 = vunpack.c.h.b16 %v122
    %v557 = vunpack.c.l.b16 %v123
    %v558 = vunpack.c.h.b16 %v123
    %v559 = vunpack.c.l.b16 %v124
    %v560 = vunpack.c.h.b16 %v124
    %v561 = vunpack.c.l.b16 %v125
    %v562 = vunpack.c.h.b16 %v125
    %v563 = vunpack.c.l.b16 %v126
    %v564 = vunpack.c.h.b16 %v126
    %v565 = vunpack.c.l.b16 %v127
    %v566 = vunpack.c.h.b16 %v127
    %v567 = vunpack.c.l.b16 %v128
    %v568 = vunpack.c.h.b16 %v128
    %v569 = vunpack.c.l.b16 %v129
    %v570 = vunpack.c.h.b16 %v129
    %v571 = vunpack.c.l.b16 %v130
    %v572 = vunpack.c.h.b16 %v130
    %v573 = vunpack.c.l.b16 %v131
    %v574 = vunpack.c.h.b16 %v131
    %v575 = vunpack.c.l.b16 %v132
    %v576 = vunpack.c.h.b16 %v132
    %v577 = vunpack.c.l.b16 %v133
    %v578 = vunpack.c.h.b16 %v133
    %v579 = vunpack.c.l.b16 %v134
    %v580 = vunpack.c.h.b16 %v134
    %v581 = vunpack.c.l.b16 %v135
    %v582 = vunpack.c.h.b16 %v135
    %v583 = vunpack.c.l.b16 %v136
    %v584 = vunpack.c.h.b16 %v136
    %v585 = vunpack.c.l.b16 %v137
    %v586 = vunpack.c.h.b16 %v137
    %v587 = vunpack.c.l.b16 %v138
    %v588 = vunpack.c.h.b16 %v138
    %v589 = vunpack.c.l.b16 %v139
    %v590 = vunpack.c.h.b16 %v139
    %v591 = vunpack.c.l.b16 %v140
    %v592 = vunpack.c.h.b16 %v140
    %v593 = vunpack.c.l.b16 %v141
    %v594 = vunpack.c.h.b16 %v141
    %v595 = vunpack.c.l.b16 %v142
    %v596 = vunpack.c.h.b16 %v142
    %v597 = vunpack.c.l.b16 %v143
    %v598 = vunpack.c.h.b16 %v143
    %v599 = vunpack.c.l.b16 %v144
    %v600 = vunpack.c.h.b16 %v144
    %v601 = vunpack.c.l.b16 %v145
    %v602 = vunpack.c.h.b16 %v145
    %v603 = vunpack.c.l.b16 %v146
    %v604 = vunpack.c.h.b16 %v146
    %v605 = vunpack.c.l.b16 %v147
    %v606 = vunpack.c.h.b16 %v147
    %v607 = vunpack.c.l.b16 %v148
    %v608 = vunpack.c.h.b16 %v148
    %v609 = vunpack.c.l.b16 %v149
    %v610 = vunpack.c.h.b16 %v149
    %v611 = vunpack.c.l.b16 %v150
    %v612 = vunpack.c.h.b16 %v150
    %v613 = vunpack.c.l.b16 %v151
    %v614 = vunpack.c.h.b16 %v151
    %v615 = vunpack.c.l.b16 %v152
    %v616 = vunpack.c.h.b16 %v152
    %v617 = vunpack.c.l.b16 %v153
    %v618 = vunpack.c.h.b16 %v153
    %v619 = vunpack.c.l.b16 %v154
    %v620 = vunpack.c.h.b16 %v154
    %v621 = vunpack.c.l.b16 %v155
    %v622 = vunpack.c.h.b16 %v155
    %v623 = vunpack.c.l.b16 %v156
    %v624 = vunpack.c.h.b16 %v156
    %v625 = vunpack.c.l.b16 %v157
    %v626 = vunpack.c.h.b16 %v157
    %v627 = vunpack.c.l.b16 %v158
    %v628 = vunpack.c.h.b16 %v158
    %v629 = vunpack.c.l.b16 %v159
    %v630 = vunpack.c.h.b16 %v159
    %v631 = vunpack.c.l.b16 %v160
    %v632 = vunpack.c.h.b16 %v160
    %v633 = vunpack.c.l.b16 %v161
    %v634 = vunpack.c.h.b16 %v161
    %v635 = vunpack.c.l.b16 %v162
    %v636 = vunpack.c.h.b16 %v162
    %v637 = vunpack.c.l.b16 %v163
    %v638 = vunpack.c.h.b16 %v163
    %v639 = vunpack.c.l.b16 %v164
    %v640 = vunpack.c.h.b16 %v164
    %v641 = vpack.c.b16 %v517, %v513
    %v642 = vpack.c.b16 %v518, %v514
    %v643 = vpack.c.b16 %v519, %v515
    %v644 = vpack.c.b16 %v520, %v516
    %v645 = vpack.c.b16 %v525, %v521
    %v646 = vpack.c.b16 %v526, %v522
    %v647 = vpack.c.b16 %v527, %v523
    %v648 = vpack.c.b16 %v528, %v524
    %v649 = vpack.c.b16 %v533, %v529
    %v650 = vpack.c.b16 %v534, %v530
    %v651 = vpack.c.b16 %v535, %v531
    %v652 = vpack.c.b16 %v536, %v532
    %v653 = vpack.c.b16 %v541, %v537
    %v654 = vpack.c.b16 %v542, %v538
    %v655 = vpack.c.b16 %v543, %v539
    %v656 = vpack.c.b16 %v544, %v540
    %v657 = vpack.c.b16 %v549, %v545
    %v658 = vpack.c.b16 %v550, %v546
    %v659 = vpack.c.b16 %v551, %v547
    %v660 = vpack.c.b16 %v552, %v548
    %v661 = vpack.c.b16 %v557, %v553
    %v662 = vpack.c.b16 %v558, %v554
    %v663 = vpack.c.b16 %v559, %v555
    %v664 = vpack.c.b16 %v560, %v556
    %v665 = vpack.c.b16 %v565, %v561
    %v666 = vpack.c.b16 %v566, %v562
    %v667 = vpack.c.b16 %v567, %v563
    %v668 = vpack.c.b16 %v568, %v564
    %v669 = vpack.c.b16 %v573, %v569
    %v670 = vpack.c.b16 %v574, %v570
    %v671 = vpack.c.b16 %v575, %v571
    %v672 = vpack.c.b16 %v576, %v572
    %v673 = vpack.c.b16 %v581, %v577
    %v674 = vpack.c.b16 %v582, %v578
    %v675 = vpack.c.b16 %v583, %v579
    %v676 = vpack.c.b16 %v584, %v580
    %v677 = vpack.c.b16 %v589, %v585
    %v678 = vpack.c.b16 %v590, %v586
    %v679 = vpack.c.b16 %v591, %v587
    %v680 = vpack.c.b16 %v592, %v588
    %v681 = vpack.c.b16 %v597, %v593
    %v682 = vpack.c.b16 %v598, %v594
    %v683 = vpack.c.b16 %v599, %v595
    %v684 = vpack.c.b16 %v600, %v596
    %v685 = vpack.c.b16 %v605, %v601
    %v686 = vpack.c.b16 %v606, %v602
    %v687 = vpack.c.b16 %v607, %v603
    %v688 = vpack.c.b16 %v608, %v604
    %v689 = vpack.c.b16 %v613, %v609
    %v690 = vpack.c.b16 %v614, %v610
    %v691 = vpack.c.b16 %v615, %v611
    %v692 = vpack.c.b16 %v616, %v612
    %v693 = vpack.c.b16 %v621, %v617
    %v694 = vpack.c.b16 %v622, %v618
    %v695 = vpack.c.b16 %v623, %v619
    %v696 = vpack.c.b16 %v624, %v620
    %v697 = vpack.c.b16 %v629, %v625
    %v698 = vpack.c.b16 %v630, %v626
    %v699 = vpack.c.b16 %v631, %v627
    %v700 = vpack.c.b16 %v632, %v628
    %v701 = vpack.c.b16 %v637, %v633
    %v702 = vpack.c.b16 %v638, %v634
    %v703 = vpack.c.b16 %v639, %v635
    %v704 = vpack.c.b16 %v640, %v636
    %769 = vmatprep.subr.bf16.mxu0 %v670
    %770 = vmatpush1.bf16.msra.mxu0 %v669
    %771 = vmatprep.subr.bf16.mxu0 %v666
    %772 = vmatpush1.bf16.msra.mxu0 %v665
    %773 = vmatprep.subr.bf16.mxu0 %v662
    %774 = vmatpush1.bf16.msra.mxu0 %v661
    %775 = vmatprep.subr.bf16.mxu0 %v658
    %776 = vmatpush1.bf16.msra.mxu0 %v657
    %777 = vmatprep.subr.bf16.mxu0 %v654
    %778 = vmatpush1.bf16.msra.mxu0 %v653
    %779 = vmatprep.subr.bf16.mxu0 %v650
    %780 = vmatpush1.bf16.msra.mxu0 %v649
    %781 = vmatprep.subr.bf16.mxu0 %v646
    %782 = vmatpush1.bf16.msra.mxu0 %v645
    %783 = vmatprep.subr.bf16.mxu0 %v642
    %784 = vmatpush1.bf16.msra.mxu0 %v641
    %785 = vmatprep.subr.bf16.mxu0 %v702
    %786 = vmatpush2.bf16.msra.mxu0 %v701
    %787 = vmatprep.subr.bf16.mxu0 %v698
    %788 = vmatpush2.bf16.msra.mxu0 %v697
    %789 = vmatprep.subr.bf16.mxu0 %v694
    %790 = vmatpush2.bf16.msra.mxu0 %v693
    %791 = vmatprep.subr.bf16.mxu0 %v690
    %792 = vmatpush2.bf16.msra.mxu0 %v689
    %793 = vmatprep.subr.bf16.mxu0 %v686
    %794 = vmatpush2.bf16.msra.mxu0 %v685
    %795 = vmatprep.subr.bf16.mxu0 %v682
    %796 = vmatpush2.bf16.msra.mxu0 %v681
    %797 = vmatprep.subr.bf16.mxu0 %v678
    %798 = vmatpush2.bf16.msra.mxu0 %v677
    %799 = vmatprep.subr.bf16.mxu0 %v674
    %800 = vmatpush2.bf16.msra.mxu0 %v673
    %801 = vmatprep.mubr.bf16.mxu0 %v100
    %802 = vmatmul.mubr.bf16.gmra.mxu0 %v99
    %v803 = vpop.f32.mrf.mxu0
    %v804 = vadd.f32 %v402, %v803
    %v805 = vpop.f32.mrf.mxu0
    %v806 = vadd.f32 %v404, %v805
    %v807 = vpop.f32.mrf.mxu0
    %v808 = vpop.f32.mrf.mxu0
    %809 = vdwg.mxu0
    %810 = vmatprep.subr.bf16.mxu0 %v672
    %811 = vmatpush1.bf16.msra.mxu0 %v671
    %812 = vmatprep.subr.bf16.mxu0 %v668
    %813 = vmatpush1.bf16.msra.mxu0 %v667
    %814 = vmatprep.subr.bf16.mxu0 %v664
    %815 = vmatpush1.bf16.msra.mxu0 %v663
    %816 = vmatprep.subr.bf16.mxu0 %v660
    %817 = vmatpush1.bf16.msra.mxu0 %v659
    %818 = vmatprep.subr.bf16.mxu0 %v656
    %819 = vmatpush1.bf16.msra.mxu0 %v655
    %820 = vmatprep.subr.bf16.mxu0 %v652
    %821 = vmatpush1.bf16.msra.mxu0 %v651
    %822 = vmatprep.subr.bf16.mxu0 %v648
    %823 = vmatpush1.bf16.msra.mxu0 %v647
    %824 = vmatprep.subr.bf16.mxu0 %v644
    %825 = vmatpush1.bf16.msra.mxu0 %v643
    %826 = vmatprep.subr.bf16.mxu0 %v704
    %827 = vmatpush2.bf16.msra.mxu0 %v703
    %828 = vmatprep.subr.bf16.mxu0 %v700
    %829 = vmatpush2.bf16.msra.mxu0 %v699
    %830 = vmatprep.subr.bf16.mxu0 %v696
    %831 = vmatpush2.bf16.msra.mxu0 %v695
    %832 = vmatprep.subr.bf16.mxu0 %v692
    %833 = vmatpush2.bf16.msra.mxu0 %v691
    %834 = vmatprep.subr.bf16.mxu0 %v688
    %835 = vmatpush2.bf16.msra.mxu0 %v687
    %836 = vmatprep.subr.bf16.mxu0 %v684
    %837 = vmatpush2.bf16.msra.mxu0 %v683
    %838 = vmatprep.subr.bf16.mxu0 %v680
    %839 = vmatpush2.bf16.msra.mxu0 %v679
    %840 = vmatprep.subr.bf16.mxu0 %v676
    %841 = vmatpush2.bf16.msra.mxu0 %v675
    %842 = vmatprep.mubr.bf16.mxu0 %v100
    %843 = vmatmul.mubr.bf16.gmra.mxu0 %v99
    %v844 = vpop.f32.mrf.mxu0
    %v845 = vadd.f32 %v443, %v844
    %v846 = vpop.f32.mrf.mxu0
    %v847 = vadd.f32 %v445, %v846
    %v848 = vpop.f32.mrf.mxu0
    %v849 = vpop.f32.mrf.mxu0
    %850 = vdwg.mxu0
    %v851 = vmul.f32 %v804, 0.2
    %v852 = vmul.f32 %v806, 0.2
    %v853 = vmul.f32 %v845, 0.2
    %v854 = vmul.f32 %v847, 0.2
    %v855 = vmax.f32 %v804, %v851
    %v856 = vmax.f32 %v806, %v852
    %v857 = vmax.f32 %v845, %v853
    %v858 = vmax.f32 %v847, %v854
    %v859 = vpack.c.bf16 %v855, %v855
    %v860 = vpack.c.bf16 %v856, %v856
    %v861 = vpack.c.bf16 %v857, %v857
    %v862 = vpack.c.bf16 %v858, %v858
    %v863 = vld [vmem:[#allocation8] sm:$0xff]
    %v864 = vld [vmem:[#allocation8 + $0x8] sm:$0xff]
    %v865 = vld [vmem:[#allocation8 + $0x10] sm:$0xff]
    %v866 = vld [vmem:[#allocation8 + $0x18] sm:$0xff]
    %v867 = vld [vmem:[#allocation8 + $0x20] sm:$0xff]
    %v868 = vld [vmem:[#allocation8 + $0x28] sm:$0xff]
    %v869 = vld [vmem:[#allocation8 + $0x30] sm:$0xff]
    %v870 = vld [vmem:[#allocation8 + $0x38] sm:$0xff]
    %v871 = vld [vmem:[#allocation8 + $0x40] sm:$0xff]
    %v872 = vld [vmem:[#allocation8 + $0x48] sm:$0xff]
    %v873 = vld [vmem:[#allocation8 + $0x50] sm:$0xff]
    %v874 = vld [vmem:[#allocation8 + $0x58] sm:$0xff]
    %v875 = vld [vmem:[#allocation8 + $0x60] sm:$0xff]
    %v876 = vld [vmem:[#allocation8 + $0x68] sm:$0xff]
    %v877 = vld [vmem:[#allocation8 + $0x70] sm:$0xff]
    %v878 = vld [vmem:[#allocation8 + $0x78] sm:$0xff]
    %v879 = vld [vmem:[#allocation8 + $0x80] sm:$0xff]
    %v880 = vld [vmem:[#allocation8 + $0x88] sm:$0xff]
    %v881 = vld [vmem:[#allocation8 + $0x90] sm:$0xff]
    %v882 = vld [vmem:[#allocation8 + $0x98] sm:$0xff]
    %v883 = vld [vmem:[#allocation8 + $0xa0] sm:$0xff]
    %v884 = vld [vmem:[#allocation8 + $0xa8] sm:$0xff]
    %v885 = vld [vmem:[#allocation8 + $0xb0] sm:$0xff]
    %v886 = vld [vmem:[#allocation8 + $0xb8] sm:$0xff]
    %v887 = vld [vmem:[#allocation8 + $0xc0] sm:$0xff]
    %v888 = vld [vmem:[#allocation8 + $0xc8] sm:$0xff]
    %v889 = vld [vmem:[#allocation8 + $0xd0] sm:$0xff]
    %v890 = vld [vmem:[#allocation8 + $0xd8] sm:$0xff]
    %v891 = vld [vmem:[#allocation8 + $0xe0] sm:$0xff]
    %v892 = vld [vmem:[#allocation8 + $0xe8] sm:$0xff]
    %v893 = vld [vmem:[#allocation8 + $0xf0] sm:$0xff]
    %v894 = vld [vmem:[#allocation8 + $0xf8] sm:$0xff]
    %v895 = vld [vmem:[#allocation8 + $0x100] sm:$0xff]
    %v896 = vld [vmem:[#allocation8 + $0x108] sm:$0xff]
    %v897 = vld [vmem:[#allocation8 + $0x110] sm:$0xff]
    %v898 = vld [vmem:[#allocation8 + $0x118] sm:$0xff]
    %v899 = vld [vmem:[#allocation8 + $0x120] sm:$0xff]
    %v900 = vld [vmem:[#allocation8 + $0x128] sm:$0xff]
    %v901 = vld [vmem:[#allocation8 + $0x130] sm:$0xff]
    %v902 = vld [vmem:[#allocation8 + $0x138] sm:$0xff]
    %v903 = vld [vmem:[#allocation8 + $0x140] sm:$0xff]
    %v904 = vld [vmem:[#allocation8 + $0x148] sm:$0xff]
    %v905 = vld [vmem:[#allocation8 + $0x150] sm:$0xff]
    %v906 = vld [vmem:[#allocation8 + $0x158] sm:$0xff]
    %v907 = vld [vmem:[#allocation8 + $0x160] sm:$0xff]
    %v908 = vld [vmem:[#allocation8 + $0x168] sm:$0xff]
    %v909 = vld [vmem:[#allocation8 + $0x170] sm:$0xff]
    %v910 = vld [vmem:[#allocation8 + $0x178] sm:$0xff]
    %v911 = vld [vmem:[#allocation8 + $0x180] sm:$0xff]
    %v912 = vld [vmem:[#allocation8 + $0x188] sm:$0xff]
    %v913 = vld [vmem:[#allocation8 + $0x190] sm:$0xff]
    %v914 = vld [vmem:[#allocation8 + $0x198] sm:$0xff]
    %v915 = vld [vmem:[#allocation8 + $0x1a0] sm:$0xff]
    %v916 = vld [vmem:[#allocation8 + $0x1a8] sm:$0xff]
    %v917 = vld [vmem:[#allocation8 + $0x1b0] sm:$0xff]
    %v918 = vld [vmem:[#allocation8 + $0x1b8] sm:$0xff]
    %v919 = vld [vmem:[#allocation8 + $0x1c0] sm:$0xff]
    %v920 = vld [vmem:[#allocation8 + $0x1c8] sm:$0xff]
    %v921 = vld [vmem:[#allocation8 + $0x1d0] sm:$0xff]
    %v922 = vld [vmem:[#allocation8 + $0x1d8] sm:$0xff]
    %v923 = vld [vmem:[#allocation8 + $0x1e0] sm:$0xff]
    %v924 = vld [vmem:[#allocation8 + $0x1e8] sm:$0xff]
    %v925 = vld [vmem:[#allocation8 + $0x1f0] sm:$0xff]
    %v926 = vld [vmem:[#allocation8 + $0x1f8] sm:$0xff]
    %v927 = vld [vmem:[#allocation8 + $0x200] sm:$0xff]
    %v928 = vld [vmem:[#allocation8 + $0x208] sm:$0xff]
    %v929 = vld [vmem:[#allocation8 + $0x210] sm:$0xff]
    %v930 = vld [vmem:[#allocation8 + $0x218] sm:$0xff]
    %v931 = vld [vmem:[#allocation8 + $0x220] sm:$0xff]
    %v932 = vld [vmem:[#allocation8 + $0x228] sm:$0xff]
    %v933 = vld [vmem:[#allocation8 + $0x230] sm:$0xff]
    %v934 = vld [vmem:[#allocation8 + $0x238] sm:$0xff]
    %v935 = vld [vmem:[#allocation8 + $0x240] sm:$0xff]
    %v936 = vld [vmem:[#allocation8 + $0x248] sm:$0xff]
    %v937 = vld [vmem:[#allocation8 + $0x250] sm:$0xff]
    %v938 = vld [vmem:[#allocation8 + $0x258] sm:$0xff]
    %v939 = vld [vmem:[#allocation8 + $0x260] sm:$0xff]
    %v940 = vld [vmem:[#allocation8 + $0x268] sm:$0xff]
    %v941 = vld [vmem:[#allocation8 + $0x270] sm:$0xff]
    %v942 = vld [vmem:[#allocation8 + $0x278] sm:$0xff]
    %v943 = vld [vmem:[#allocation8 + $0x280] sm:$0xff]
    %v944 = vld [vmem:[#allocation8 + $0x288] sm:$0xff]
    %v945 = vld [vmem:[#allocation8 + $0x290] sm:$0xff]
    %v946 = vld [vmem:[#allocation8 + $0x298] sm:$0xff]
    %v947 = vld [vmem:[#allocation8 + $0x2a0] sm:$0xff]
    %v948 = vld [vmem:[#allocation8 + $0x2a8] sm:$0xff]
    %v949 = vld [vmem:[#allocation8 + $0x2b0] sm:$0xff]
    %v950 = vld [vmem:[#allocation8 + $0x2b8] sm:$0xff]
    %v951 = vld [vmem:[#allocation8 + $0x2c0] sm:$0xff]
    %v952 = vld [vmem:[#allocation8 + $0x2c8] sm:$0xff]
    %v953 = vld [vmem:[#allocation8 + $0x2d0] sm:$0xff]
    %v954 = vld [vmem:[#allocation8 + $0x2d8] sm:$0xff]
    %v955 = vld [vmem:[#allocation8 + $0x2e0] sm:$0xff]
    %v956 = vld [vmem:[#allocation8 + $0x2e8] sm:$0xff]
    %v957 = vld [vmem:[#allocation8 + $0x2f0] sm:$0xff]
    %v958 = vld [vmem:[#allocation8 + $0x2f8] sm:$0xff]
    %v959 = vld [vmem:[#allocation8 + $0x300] sm:$0xff]
    %v960 = vld [vmem:[#allocation8 + $0x308] sm:$0xff]
    %v961 = vld [vmem:[#allocation8 + $0x310] sm:$0xff]
    %v962 = vld [vmem:[#allocation8 + $0x318] sm:$0xff]
    %v963 = vld [vmem:[#allocation8 + $0x320] sm:$0xff]
    %v964 = vld [vmem:[#allocation8 + $0x328] sm:$0xff]
    %v965 = vld [vmem:[#allocation8 + $0x330] sm:$0xff]
    %v966 = vld [vmem:[#allocation8 + $0x338] sm:$0xff]
    %v967 = vld [vmem:[#allocation8 + $0x340] sm:$0xff]
    %v968 = vld [vmem:[#allocation8 + $0x348] sm:$0xff]
    %v969 = vld [vmem:[#allocation8 + $0x350] sm:$0xff]
    %v970 = vld [vmem:[#allocation8 + $0x358] sm:$0xff]
    %v971 = vld [vmem:[#allocation8 + $0x360] sm:$0xff]
    %v972 = vld [vmem:[#allocation8 + $0x368] sm:$0xff]
    %v973 = vld [vmem:[#allocation8 + $0x370] sm:$0xff]
    %v974 = vld [vmem:[#allocation8 + $0x378] sm:$0xff]
    %v975 = vld [vmem:[#allocation8 + $0x380] sm:$0xff]
    %v976 = vld [vmem:[#allocation8 + $0x388] sm:$0xff]
    %v977 = vld [vmem:[#allocation8 + $0x390] sm:$0xff]
    %v978 = vld [vmem:[#allocation8 + $0x398] sm:$0xff]
    %v979 = vld [vmem:[#allocation8 + $0x3a0] sm:$0xff]
    %v980 = vld [vmem:[#allocation8 + $0x3a8] sm:$0xff]
    %v981 = vld [vmem:[#allocation8 + $0x3b0] sm:$0xff]
    %v982 = vld [vmem:[#allocation8 + $0x3b8] sm:$0xff]
    %v983 = vld [vmem:[#allocation8 + $0x3c0] sm:$0xff]
    %v984 = vld [vmem:[#allocation8 + $0x3c8] sm:$0xff]
    %v985 = vld [vmem:[#allocation8 + $0x3d0] sm:$0xff]
    %v986 = vld [vmem:[#allocation8 + $0x3d8] sm:$0xff]
    %v987 = vld [vmem:[#allocation8 + $0x3e0] sm:$0xff]
    %v988 = vld [vmem:[#allocation8 + $0x3e8] sm:$0xff]
    %v989 = vld [vmem:[#allocation8 + $0x3f0] sm:$0xff]
    %v990 = vld [vmem:[#allocation8 + $0x3f8] sm:$0xff]
    %v991 = vld [vmem:[%s7] ss:$4 sm:$0xf]
    %v993 = vlaneseq
    %v994 = vshrl.u32 %v993, 7
    %v995 = vsub.s32 0, %v994
    %v996 = vrot.slane %v991, %v995
    %v997 = vlaneseq
    %v998 = vshrl.u32 %v997, 7
    %v999 = vsub.s32 1, %v998
    %v1000 = vrot.slane %v991, %v999
    %v1001 = vlaneseq
    %v1002 = vshrl.u32 %v1001, 7
    %v1003 = vsub.s32 2, %v1002
    %v1004 = vrot.slane %v991, %v1003
    %v1005 = vlaneseq
    %v1006 = vshrl.u32 %v1005, 7
    %v1007 = vsub.s32 3, %v1006
    %v1008 = vrot.slane %v991, %v1007
    %v1141 = vunpack.c.l.b16 %v863
    %v1142 = vunpack.c.h.b16 %v863
    %v1143 = vunpack.c.l.b16 %v864
    %v1144 = vunpack.c.h.b16 %v864
    %v1145 = vunpack.c.l.b16 %v865
    %v1146 = vunpack.c.h.b16 %v865
    %v1147 = vunpack.c.l.b16 %v866
    %v1148 = vunpack.c.h.b16 %v866
    %v1149 = vunpack.c.l.b16 %v867
    %v1150 = vunpack.c.h.b16 %v867
    %v1151 = vunpack.c.l.b16 %v868
    %v1152 = vunpack.c.h.b16 %v868
    %v1153 = vunpack.c.l.b16 %v869
    %v1154 = vunpack.c.h.b16 %v869
    %v1155 = vunpack.c.l.b16 %v870
    %v1156 = vunpack.c.h.b16 %v870
    %v1157 = vunpack.c.l.b16 %v871
    %v1158 = vunpack.c.h.b16 %v871
    %v1159 = vunpack.c.l.b16 %v872
    %v1160 = vunpack.c.h.b16 %v872
    %v1161 = vunpack.c.l.b16 %v873
    %v1162 = vunpack.c.h.b16 %v873
    %v1163 = vunpack.c.l.b16 %v874
    %v1164 = vunpack.c.h.b16 %v874
    %v1165 = vunpack.c.l.b16 %v875
    %v1166 = vunpack.c.h.b16 %v875
    %v1167 = vunpack.c.l.b16 %v876
    %v1168 = vunpack.c.h.b16 %v876
    %v1169 = vunpack.c.l.b16 %v877
    %v1170 = vunpack.c.h.b16 %v877
    %v1171 = vunpack.c.l.b16 %v878
    %v1172 = vunpack.c.h.b16 %v878
    %v1173 = vunpack.c.l.b16 %v879
    %v1174 = vunpack.c.h.b16 %v879
    %v1175 = vunpack.c.l.b16 %v880
    %v1176 = vunpack.c.h.b16 %v880
    %v1177 = vunpack.c.l.b16 %v881
    %v1178 = vunpack.c.h.b16 %v881
    %v1179 = vunpack.c.l.b16 %v882
    %v1180 = vunpack.c.h.b16 %v882
    %v1181 = vunpack.c.l.b16 %v883
    %v1182 = vunpack.c.h.b16 %v883
    %v1183 = vunpack.c.l.b16 %v884
    %v1184 = vunpack.c.h.b16 %v884
    %v1185 = vunpack.c.l.b16 %v885
    %v1186 = vunpack.c.h.b16 %v885
    %v1187 = vunpack.c.l.b16 %v886
    %v1188 = vunpack.c.h.b16 %v886
    %v1189 = vunpack.c.l.b16 %v887
    %v1190 = vunpack.c.h.b16 %v887
    %v1191 = vunpack.c.l.b16 %v888
    %v1192 = vunpack.c.h.b16 %v888
    %v1193 = vunpack.c.l.b16 %v889
    %v1194 = vunpack.c.h.b16 %v889
    %v1195 = vunpack.c.l.b16 %v890
    %v1196 = vunpack.c.h.b16 %v890
    %v1197 = vunpack.c.l.b16 %v891
    %v1198 = vunpack.c.h.b16 %v891
    %v1199 = vunpack.c.l.b16 %v892
    %v1200 = vunpack.c.h.b16 %v892
    %v1201 = vunpack.c.l.b16 %v893
    %v1202 = vunpack.c.h.b16 %v893
    %v1203 = vunpack.c.l.b16 %v894
    %v1204 = vunpack.c.h.b16 %v894
    %v1205 = vunpack.c.l.b16 %v895
    %v1206 = vunpack.c.h.b16 %v895
    %v1207 = vunpack.c.l.b16 %v896
    %v1208 = vunpack.c.h.b16 %v896
    %v1209 = vunpack.c.l.b16 %v897
    %v1210 = vunpack.c.h.b16 %v897
    %v1211 = vunpack.c.l.b16 %v898
    %v1212 = vunpack.c.h.b16 %v898
    %v1213 = vunpack.c.l.b16 %v899
    %v1214 = vunpack.c.h.b16 %v899
    %v1215 = vunpack.c.l.b16 %v900
    %v1216 = vunpack.c.h.b16 %v900
    %v1217 = vunpack.c.l.b16 %v901
    %v1218 = vunpack.c.h.b16 %v901
    %v1219 = vunpack.c.l.b16 %v902
    %v1220 = vunpack.c.h.b16 %v902
    %v1221 = vunpack.c.l.b16 %v903
    %v1222 = vunpack.c.h.b16 %v903
    %v1223 = vunpack.c.l.b16 %v904
    %v1224 = vunpack.c.h.b16 %v904
    %v1225 = vunpack.c.l.b16 %v905
    %v1226 = vunpack.c.h.b16 %v905
    %v1227 = vunpack.c.l.b16 %v906
    %v1228 = vunpack.c.h.b16 %v906
    %v1229 = vunpack.c.l.b16 %v907
    %v1230 = vunpack.c.h.b16 %v907
    %v1231 = vunpack.c.l.b16 %v908
    %v1232 = vunpack.c.h.b16 %v908
    %v1233 = vunpack.c.l.b16 %v909
    %v1234 = vunpack.c.h.b16 %v909
    %v1235 = vunpack.c.l.b16 %v910
    %v1236 = vunpack.c.h.b16 %v910
    %v1237 = vunpack.c.l.b16 %v911
    %v1238 = vunpack.c.h.b16 %v911
    %v1239 = vunpack.c.l.b16 %v912
    %v1240 = vunpack.c.h.b16 %v912
    %v1241 = vunpack.c.l.b16 %v913
    %v1242 = vunpack.c.h.b16 %v913
    %v1243 = vunpack.c.l.b16 %v914
    %v1244 = vunpack.c.h.b16 %v914
    %v1245 = vunpack.c.l.b16 %v915
    %v1246 = vunpack.c.h.b16 %v915
    %v1247 = vunpack.c.l.b16 %v916
    %v1248 = vunpack.c.h.b16 %v916
    %v1249 = vunpack.c.l.b16 %v917
    %v1250 = vunpack.c.h.b16 %v917
    %v1251 = vunpack.c.l.b16 %v918
    %v1252 = vunpack.c.h.b16 %v918
    %v1253 = vunpack.c.l.b16 %v919
    %v1254 = vunpack.c.h.b16 %v919
    %v1255 = vunpack.c.l.b16 %v920
    %v1256 = vunpack.c.h.b16 %v920
    %v1257 = vunpack.c.l.b16 %v921
    %v1258 = vunpack.c.h.b16 %v921
    %v1259 = vunpack.c.l.b16 %v922
    %v1260 = vunpack.c.h.b16 %v922
    %v1261 = vunpack.c.l.b16 %v923
    %v1262 = vunpack.c.h.b16 %v923
    %v1263 = vunpack.c.l.b16 %v924
    %v1264 = vunpack.c.h.b16 %v924
    %v1265 = vunpack.c.l.b16 %v925
    %v1266 = vunpack.c.h.b16 %v925
    %v1267 = vunpack.c.l.b16 %v926
    %v1268 = vunpack.c.h.b16 %v926
    %v1269 = vunpack.c.l.b16 %v927
    %v1270 = vunpack.c.h.b16 %v927
    %v1271 = vunpack.c.l.b16 %v928
    %v1272 = vunpack.c.h.b16 %v928
    %v1273 = vunpack.c.l.b16 %v929
    %v1274 = vunpack.c.h.b16 %v929
    %v1275 = vunpack.c.l.b16 %v930
    %v1276 = vunpack.c.h.b16 %v930
    %v1277 = vunpack.c.l.b16 %v931
    %v1278 = vunpack.c.h.b16 %v931
    %v1279 = vunpack.c.l.b16 %v932
    %v1280 = vunpack.c.h.b16 %v932
    %v1281 = vunpack.c.l.b16 %v933
    %v1282 = vunpack.c.h.b16 %v933
    %v1283 = vunpack.c.l.b16 %v934
    %v1284 = vunpack.c.h.b16 %v934
    %v1285 = vunpack.c.l.b16 %v935
    %v1286 = vunpack.c.h.b16 %v935
    %v1287 = vunpack.c.l.b16 %v936
    %v1288 = vunpack.c.h.b16 %v936
    %v1289 = vunpack.c.l.b16 %v937
    %v1290 = vunpack.c.h.b16 %v937
    %v1291 = vunpack.c.l.b16 %v938
    %v1292 = vunpack.c.h.b16 %v938
    %v1293 = vunpack.c.l.b16 %v939
    %v1294 = vunpack.c.h.b16 %v939
    %v1295 = vunpack.c.l.b16 %v940
    %v1296 = vunpack.c.h.b16 %v940
    %v1297 = vunpack.c.l.b16 %v941
    %v1298 = vunpack.c.h.b16 %v941
    %v1299 = vunpack.c.l.b16 %v942
    %v1300 = vunpack.c.h.b16 %v942
    %v1301 = vunpack.c.l.b16 %v943
    %v1302 = vunpack.c.h.b16 %v943
    %v1303 = vunpack.c.l.b16 %v944
    %v1304 = vunpack.c.h.b16 %v944
    %v1305 = vunpack.c.l.b16 %v945
    %v1306 = vunpack.c.h.b16 %v945
    %v1307 = vunpack.c.l.b16 %v946
    %v1308 = vunpack.c.h.b16 %v946
    %v1309 = vunpack.c.l.b16 %v947
    %v1310 = vunpack.c.h.b16 %v947
    %v1311 = vunpack.c.l.b16 %v948
    %v1312 = vunpack.c.h.b16 %v948
    %v1313 = vunpack.c.l.b16 %v949
    %v1314 = vunpack.c.h.b16 %v949
    %v1315 = vunpack.c.l.b16 %v950
    %v1316 = vunpack.c.h.b16 %v950
    %v1317 = vunpack.c.l.b16 %v951
    %v1318 = vunpack.c.h.b16 %v951
    %v1319 = vunpack.c.l.b16 %v952
    %v1320 = vunpack.c.h.b16 %v952
    %v1321 = vunpack.c.l.b16 %v953
    %v1322 = vunpack.c.h.b16 %v953
    %v1323 = vunpack.c.l.b16 %v954
    %v1324 = vunpack.c.h.b16 %v954
    %v1325 = vunpack.c.l.b16 %v955
    %v1326 = vunpack.c.h.b16 %v955
    %v1327 = vunpack.c.l.b16 %v956
    %v1328 = vunpack.c.h.b16 %v956
    %v1329 = vunpack.c.l.b16 %v957
    %v1330 = vunpack.c.h.b16 %v957
    %v1331 = vunpack.c.l.b16 %v958
    %v1332 = vunpack.c.h.b16 %v958
    %v1333 = vunpack.c.l.b16 %v959
    %v1334 = vunpack.c.h.b16 %v959
    %v1335 = vunpack.c.l.b16 %v960
    %v1336 = vunpack.c.h.b16 %v960
    %v1337 = vunpack.c.l.b16 %v961
    %v1338 = vunpack.c.h.b16 %v961
    %v1339 = vunpack.c.l.b16 %v962
    %v1340 = vunpack.c.h.b16 %v962
    %v1341 = vunpack.c.l.b16 %v963
    %v1342 = vunpack.c.h.b16 %v963
    %v1343 = vunpack.c.l.b16 %v964
    %v1344 = vunpack.c.h.b16 %v964
    %v1345 = vunpack.c.l.b16 %v965
    %v1346 = vunpack.c.h.b16 %v965
    %v1347 = vunpack.c.l.b16 %v966
    %v1348 = vunpack.c.h.b16 %v966
    %v1349 = vunpack.c.l.b16 %v967
    %v1350 = vunpack.c.h.b16 %v967
    %v1351 = vunpack.c.l.b16 %v968
    %v1352 = vunpack.c.h.b16 %v968
    %v1353 = vunpack.c.l.b16 %v969
    %v1354 = vunpack.c.h.b16 %v969
    %v1355 = vunpack.c.l.b16 %v970
    %v1356 = vunpack.c.h.b16 %v970
    %v1357 = vunpack.c.l.b16 %v971
    %v1358 = vunpack.c.h.b16 %v971
    %v1359 = vunpack.c.l.b16 %v972
    %v1360 = vunpack.c.h.b16 %v972
    %v1361 = vunpack.c.l.b16 %v973
    %v1362 = vunpack.c.h.b16 %v973
    %v1363 = vunpack.c.l.b16 %v974
    %v1364 = vunpack.c.h.b16 %v974
    %v1365 = vunpack.c.l.b16 %v975
    %v1366 = vunpack.c.h.b16 %v975
    %v1367 = vunpack.c.l.b16 %v976
    %v1368 = vunpack.c.h.b16 %v976
    %v1369 = vunpack.c.l.b16 %v977
    %v1370 = vunpack.c.h.b16 %v977
    %v1371 = vunpack.c.l.b16 %v978
    %v1372 = vunpack.c.h.b16 %v978
    %v1373 = vunpack.c.l.b16 %v979
    %v1374 = vunpack.c.h.b16 %v979
    %v1375 = vunpack.c.l.b16 %v980
    %v1376 = vunpack.c.h.b16 %v980
    %v1377 = vunpack.c.l.b16 %v981
    %v1378 = vunpack.c.h.b16 %v981
    %v1379 = vunpack.c.l.b16 %v982
    %v1380 = vunpack.c.h.b16 %v982
    %v1381 = vunpack.c.l.b16 %v983
    %v1382 = vunpack.c.h.b16 %v983
    %v1383 = vunpack.c.l.b16 %v984
    %v1384 = vunpack.c.h.b16 %v984
    %v1385 = vunpack.c.l.b16 %v985
    %v1386 = vunpack.c.h.b16 %v985
    %v1387 = vunpack.c.l.b16 %v986
    %v1388 = vunpack.c.h.b16 %v986
    %v1389 = vunpack.c.l.b16 %v987
    %v1390 = vunpack.c.h.b16 %v987
    %v1391 = vunpack.c.l.b16 %v988
    %v1392 = vunpack.c.h.b16 %v988
    %v1393 = vunpack.c.l.b16 %v989
    %v1394 = vunpack.c.h.b16 %v989
    %v1395 = vunpack.c.l.b16 %v990
    %v1396 = vunpack.c.h.b16 %v990
    %v1397 = vpack.c.b16 %v1145, %v1141
    %v1398 = vpack.c.b16 %v1146, %v1142
    %v1399 = vpack.c.b16 %v1147, %v1143
    %v1400 = vpack.c.b16 %v1148, %v1144
    %v1401 = vpack.c.b16 %v1153, %v1149
    %v1402 = vpack.c.b16 %v1154, %v1150
    %v1403 = vpack.c.b16 %v1155, %v1151
    %v1404 = vpack.c.b16 %v1156, %v1152
    %v1405 = vpack.c.b16 %v1161, %v1157
    %v1406 = vpack.c.b16 %v1162, %v1158
    %v1407 = vpack.c.b16 %v1163, %v1159
    %v1408 = vpack.c.b16 %v1164, %v1160
    %v1409 = vpack.c.b16 %v1169, %v1165
    %v1410 = vpack.c.b16 %v1170, %v1166
    %v1411 = vpack.c.b16 %v1171, %v1167
    %v1412 = vpack.c.b16 %v1172, %v1168
    %v1413 = vpack.c.b16 %v1177, %v1173
    %v1414 = vpack.c.b16 %v1178, %v1174
    %v1415 = vpack.c.b16 %v1179, %v1175
    %v1416 = vpack.c.b16 %v1180, %v1176
    %v1417 = vpack.c.b16 %v1185, %v1181
    %v1418 = vpack.c.b16 %v1186, %v1182
    %v1419 = vpack.c.b16 %v1187, %v1183
    %v1420 = vpack.c.b16 %v1188, %v1184
    %v1421 = vpack.c.b16 %v1193, %v1189
    %v1422 = vpack.c.b16 %v1194, %v1190
    %v1423 = vpack.c.b16 %v1195, %v1191
    %v1424 = vpack.c.b16 %v1196, %v1192
    %v1425 = vpack.c.b16 %v1201, %v1197
    %v1426 = vpack.c.b16 %v1202, %v1198
    %v1427 = vpack.c.b16 %v1203, %v1199
    %v1428 = vpack.c.b16 %v1204, %v1200
    %v1429 = vpack.c.b16 %v1209, %v1205
    %v1430 = vpack.c.b16 %v1210, %v1206
    %v1431 = vpack.c.b16 %v1211, %v1207
    %v1432 = vpack.c.b16 %v1212, %v1208
    %v1433 = vpack.c.b16 %v1217, %v1213
    %v1434 = vpack.c.b16 %v1218, %v1214
    %v1435 = vpack.c.b16 %v1219, %v1215
    %v1436 = vpack.c.b16 %v1220, %v1216
    %v1437 = vpack.c.b16 %v1225, %v1221
    %v1438 = vpack.c.b16 %v1226, %v1222
    %v1439 = vpack.c.b16 %v1227, %v1223
    %v1440 = vpack.c.b16 %v1228, %v1224
    %v1441 = vpack.c.b16 %v1233, %v1229
    %v1442 = vpack.c.b16 %v1234, %v1230
    %v1443 = vpack.c.b16 %v1235, %v1231
    %v1444 = vpack.c.b16 %v1236, %v1232
    %v1445 = vpack.c.b16 %v1241, %v1237
    %v1446 = vpack.c.b16 %v1242, %v1238
    %v1447 = vpack.c.b16 %v1243, %v1239
    %v1448 = vpack.c.b16 %v1244, %v1240
    %v1449 = vpack.c.b16 %v1249, %v1245
    %v1450 = vpack.c.b16 %v1250, %v1246
    %v1451 = vpack.c.b16 %v1251, %v1247
    %v1452 = vpack.c.b16 %v1252, %v1248
    %v1453 = vpack.c.b16 %v1257, %v1253
    %v1454 = vpack.c.b16 %v1258, %v1254
    %v1455 = vpack.c.b16 %v1259, %v1255
    %v1456 = vpack.c.b16 %v1260, %v1256
    %v1457 = vpack.c.b16 %v1265, %v1261
    %v1458 = vpack.c.b16 %v1266, %v1262
    %v1459 = vpack.c.b16 %v1267, %v1263
    %v1460 = vpack.c.b16 %v1268, %v1264
    %v1461 = vpack.c.b16 %v1273, %v1269
    %v1462 = vpack.c.b16 %v1274, %v1270
    %v1463 = vpack.c.b16 %v1275, %v1271
    %v1464 = vpack.c.b16 %v1276, %v1272
    %v1465 = vpack.c.b16 %v1281, %v1277
    %v1466 = vpack.c.b16 %v1282, %v1278
    %v1467 = vpack.c.b16 %v1283, %v1279
    %v1468 = vpack.c.b16 %v1284, %v1280
    %v1469 = vpack.c.b16 %v1289, %v1285
    %v1470 = vpack.c.b16 %v1290, %v1286
    %v1471 = vpack.c.b16 %v1291, %v1287
    %v1472 = vpack.c.b16 %v1292, %v1288
    %v1473 = vpack.c.b16 %v1297, %v1293
    %v1474 = vpack.c.b16 %v1298, %v1294
    %v1475 = vpack.c.b16 %v1299, %v1295
    %v1476 = vpack.c.b16 %v1300, %v1296
    %v1477 = vpack.c.b16 %v1305, %v1301
    %v1478 = vpack.c.b16 %v1306, %v1302
    %v1479 = vpack.c.b16 %v1307, %v1303
    %v1480 = vpack.c.b16 %v1308, %v1304
    %v1481 = vpack.c.b16 %v1313, %v1309
    %v1482 = vpack.c.b16 %v1314, %v1310
    %v1483 = vpack.c.b16 %v1315, %v1311
    %v1484 = vpack.c.b16 %v1316, %v1312
    %v1485 = vpack.c.b16 %v1321, %v1317
    %v1486 = vpack.c.b16 %v1322, %v1318
    %v1487 = vpack.c.b16 %v1323, %v1319
    %v1488 = vpack.c.b16 %v1324, %v1320
    %v1489 = vpack.c.b16 %v1329, %v1325
    %v1490 = vpack.c.b16 %v1330, %v1326
    %v1491 = vpack.c.b16 %v1331, %v1327
    %v1492 = vpack.c.b16 %v1332, %v1328
    %v1493 = vpack.c.b16 %v1337, %v1333
    %v1494 = vpack.c.b16 %v1338, %v1334
    %v1495 = vpack.c.b16 %v1339, %v1335
    %v1496 = vpack.c.b16 %v1340, %v1336
    %v1497 = vpack.c.b16 %v1345, %v1341
    %v1498 = vpack.c.b16 %v1346, %v1342
    %v1499 = vpack.c.b16 %v1347, %v1343
    %v1500 = vpack.c.b16 %v1348, %v1344
    %v1501 = vpack.c.b16 %v1353, %v1349
    %v1502 = vpack.c.b16 %v1354, %v1350
    %v1503 = vpack.c.b16 %v1355, %v1351
    %v1504 = vpack.c.b16 %v1356, %v1352
    %v1505 = vpack.c.b16 %v1361, %v1357
    %v1506 = vpack.c.b16 %v1362, %v1358
    %v1507 = vpack.c.b16 %v1363, %v1359
    %v1508 = vpack.c.b16 %v1364, %v1360
    %v1509 = vpack.c.b16 %v1369, %v1365
    %v1510 = vpack.c.b16 %v1370, %v1366
    %v1511 = vpack.c.b16 %v1371, %v1367
    %v1512 = vpack.c.b16 %v1372, %v1368
    %v1513 = vpack.c.b16 %v1377, %v1373
    %v1514 = vpack.c.b16 %v1378, %v1374
    %v1515 = vpack.c.b16 %v1379, %v1375
    %v1516 = vpack.c.b16 %v1380, %v1376
    %v1517 = vpack.c.b16 %v1385, %v1381
    %v1518 = vpack.c.b16 %v1386, %v1382
    %v1519 = vpack.c.b16 %v1387, %v1383
    %v1520 = vpack.c.b16 %v1388, %v1384
    %v1521 = vpack.c.b16 %v1393, %v1389
    %v1522 = vpack.c.b16 %v1394, %v1390
    %v1523 = vpack.c.b16 %v1395, %v1391
    %v1524 = vpack.c.b16 %v1396, %v1392
    %1653 = vmatprep.subr.bf16.mxu0 %v1426
    %1654 = vmatpush1.bf16.msra.mxu0 %v1425
    %1655 = vmatprep.subr.bf16.mxu0 %v1422
    %1656 = vmatpush1.bf16.msra.mxu0 %v1421
    %1657 = vmatprep.subr.bf16.mxu0 %v1418
    %1658 = vmatpush1.bf16.msra.mxu0 %v1417
    %1659 = vmatprep.subr.bf16.mxu0 %v1414
    %1660 = vmatpush1.bf16.msra.mxu0 %v1413
    %1661 = vmatprep.subr.bf16.mxu0 %v1410
    %1662 = vmatpush1.bf16.msra.mxu0 %v1409
    %1663 = vmatprep.subr.bf16.mxu0 %v1406
    %1664 = vmatpush1.bf16.msra.mxu0 %v1405
    %1665 = vmatprep.subr.bf16.mxu0 %v1402
    %1666 = vmatpush1.bf16.msra.mxu0 %v1401
    %1667 = vmatprep.subr.bf16.mxu0 %v1398
    %1668 = vmatpush1.bf16.msra.mxu0 %v1397
    %1669 = vmatprep.subr.bf16.mxu0 %v1458
    %1670 = vmatpush2.bf16.msra.mxu0 %v1457
    %1671 = vmatprep.subr.bf16.mxu0 %v1454
    %1672 = vmatpush2.bf16.msra.mxu0 %v1453
    %1673 = vmatprep.subr.bf16.mxu0 %v1450
    %1674 = vmatpush2.bf16.msra.mxu0 %v1449
    %1675 = vmatprep.subr.bf16.mxu0 %v1446
    %1676 = vmatpush2.bf16.msra.mxu0 %v1445
    %1677 = vmatprep.subr.bf16.mxu0 %v1442
    %1678 = vmatpush2.bf16.msra.mxu0 %v1441
    %1679 = vmatprep.subr.bf16.mxu0 %v1438
    %1680 = vmatpush2.bf16.msra.mxu0 %v1437
    %1681 = vmatprep.subr.bf16.mxu0 %v1434
    %1682 = vmatpush2.bf16.msra.mxu0 %v1433
    %1683 = vmatprep.subr.bf16.mxu0 %v1430
    %1684 = vmatpush2.bf16.msra.mxu0 %v1429
    %1685 = vmatprep.mubr.bf16.mxu0 %v860
    %1686 = vmatmul.mubr.bf16.gmra.mxu0 %v859
    %v1687 = vpop.f32.mrf.mxu0
    %v1688 = vadd.f32 %v996, %v1687
    %v1689 = vpop.f32.mrf.mxu0
    %v1690 = vadd.f32 %v1000, %v1689
    %v1691 = vpop.f32.mrf.mxu0
    %v1692 = vpop.f32.mrf.mxu0
    %1693 = vdwg.mxu0
    %1694 = vmatprep.subr.bf16.mxu0 %v1490
    %1695 = vmatpush1.bf16.msra.mxu0 %v1489
    %1696 = vmatprep.subr.bf16.mxu0 %v1486
    %1697 = vmatpush1.bf16.msra.mxu0 %v1485
    %1698 = vmatprep.subr.bf16.mxu0 %v1482
    %1699 = vmatpush1.bf16.msra.mxu0 %v1481
    %1700 = vmatprep.subr.bf16.mxu0 %v1478
    %1701 = vmatpush1.bf16.msra.mxu0 %v1477
    %1702 = vmatprep.subr.bf16.mxu0 %v1474
    %1703 = vmatpush1.bf16.msra.mxu0 %v1473
    %1704 = vmatprep.subr.bf16.mxu0 %v1470
    %1705 = vmatpush1.bf16.msra.mxu0 %v1469
    %1706 = vmatprep.subr.bf16.mxu0 %v1466
    %1707 = vmatpush1.bf16.msra.mxu0 %v1465
    %1708 = vmatprep.subr.bf16.mxu0 %v1462
    %1709 = vmatpush1.bf16.msra.mxu0 %v1461
    %1710 = vmatprep.subr.bf16.mxu0 %v1522
    %1711 = vmatpush2.bf16.msra.mxu0 %v1521
    %1712 = vmatprep.subr.bf16.mxu0 %v1518
    %1713 = vmatpush2.bf16.msra.mxu0 %v1517
    %1714 = vmatprep.subr.bf16.mxu0 %v1514
    %1715 = vmatpush2.bf16.msra.mxu0 %v1513
    %1716 = vmatprep.subr.bf16.mxu0 %v1510
    %1717 = vmatpush2.bf16.msra.mxu0 %v1509
    %1718 = vmatprep.subr.bf16.mxu0 %v1506
    %1719 = vmatpush2.bf16.msra.mxu0 %v1505
    %1720 = vmatprep.subr.bf16.mxu0 %v1502
    %1721 = vmatpush2.bf16.msra.mxu0 %v1501
    %1722 = vmatprep.subr.bf16.mxu0 %v1498
    %1723 = vmatpush2.bf16.msra.mxu0 %v1497
    %1724 = vmatprep.subr.bf16.mxu0 %v1494
    %1725 = vmatpush2.bf16.msra.mxu0 %v1493
    %1726 = vmatprep.mubr.bf16.mxu0 %v862
    %1727 = vmatmul.mubr.bf16.gmra.mxu0 %v861
    %v1728 = vpop.f32.mrf.mxu0
    %v1729 = vadd.f32 %v1688, %v1728
    %v1730 = vpop.f32.mrf.mxu0
    %v1731 = vadd.f32 %v1690, %v1730
    %v1732 = vpop.f32.mrf.mxu0
    %v1733 = vpop.f32.mrf.mxu0
    %1734 = vdwg.mxu0
    %1735 = vmatprep.subr.bf16.mxu0 %v1428
    %1736 = vmatpush1.bf16.msra.mxu0 %v1427
    %1737 = vmatprep.subr.bf16.mxu0 %v1424
    %1738 = vmatpush1.bf16.msra.mxu0 %v1423
    %1739 = vmatprep.subr.bf16.mxu0 %v1420
    %1740 = vmatpush1.bf16.msra.mxu0 %v1419
    %1741 = vmatprep.subr.bf16.mxu0 %v1416
    %1742 = vmatpush1.bf16.msra.mxu0 %v1415
    %1743 = vmatprep.subr.bf16.mxu0 %v1412
    %1744 = vmatpush1.bf16.msra.mxu0 %v1411
    %1745 = vmatprep.subr.bf16.mxu0 %v1408
    %1746 = vmatpush1.bf16.msra.mxu0 %v1407
    %1747 = vmatprep.subr.bf16.mxu0 %v1404
    %1748 = vmatpush1.bf16.msra.mxu0 %v1403
    %1749 = vmatprep.subr.bf16.mxu0 %v1400
    %1750 = vmatpush1.bf16.msra.mxu0 %v1399
    %1751 = vmatprep.subr.bf16.mxu0 %v1460
    %1752 = vmatpush2.bf16.msra.mxu0 %v1459
    %1753 = vmatprep.subr.bf16.mxu0 %v1456
    %1754 = vmatpush2.bf16.msra.mxu0 %v1455
    %1755 = vmatprep.subr.bf16.mxu0 %v1452
    %1756 = vmatpush2.bf16.msra.mxu0 %v1451
    %1757 = vmatprep.subr.bf16.mxu0 %v1448
    %1758 = vmatpush2.bf16.msra.mxu0 %v1447
    %1759 = vmatprep.subr.bf16.mxu0 %v1444
    %1760 = vmatpush2.bf16.msra.mxu0 %v1443
    %1761 = vmatprep.subr.bf16.mxu0 %v1440
    %1762 = vmatpush2.bf16.msra.mxu0 %v1439
    %1763 = vmatprep.subr.bf16.mxu0 %v1436
    %1764 = vmatpush2.bf16.msra.mxu0 %v1435
    %1765 = vmatprep.subr.bf16.mxu0 %v1432
    %1766 = vmatpush2.bf16.msra.mxu0 %v1431
    %1767 = vmatprep.mubr.bf16.mxu0 %v860
    %1768 = vmatmul.mubr.bf16.gmra.mxu0 %v859
    %v1769 = vpop.f32.mrf.mxu0
    %v1770 = vadd.f32 %v1004, %v1769
    %v1771 = vpop.f32.mrf.mxu0
    %v1772 = vadd.f32 %v1008, %v1771
    %v1773 = vpop.f32.mrf.mxu0
    %v1774 = vpop.f32.mrf.mxu0
    %1775 = vdwg.mxu0
    %1776 = vmatprep.subr.bf16.mxu0 %v1492
    %1777 = vmatpush1.bf16.msra.mxu0 %v1491
    %1778 = vmatprep.subr.bf16.mxu0 %v1488
    %1779 = vmatpush1.bf16.msra.mxu0 %v1487
    %1780 = vmatprep.subr.bf16.mxu0 %v1484
    %1781 = vmatpush1.bf16.msra.mxu0 %v1483
    %1782 = vmatprep.subr.bf16.mxu0 %v1480
    %1783 = vmatpush1.bf16.msra.mxu0 %v1479
    %1784 = vmatprep.subr.bf16.mxu0 %v1476
    %1785 = vmatpush1.bf16.msra.mxu0 %v1475
    %1786 = vmatprep.subr.bf16.mxu0 %v1472
    %1787 = vmatpush1.bf16.msra.mxu0 %v1471
    %1788 = vmatprep.subr.bf16.mxu0 %v1468
    %1789 = vmatpush1.bf16.msra.mxu0 %v1467
    %1790 = vmatprep.subr.bf16.mxu0 %v1464
    %1791 = vmatpush1.bf16.msra.mxu0 %v1463
    %1792 = vmatprep.subr.bf16.mxu0 %v1524
    %1793 = vmatpush2.bf16.msra.mxu0 %v1523
    %1794 = vmatprep.subr.bf16.mxu0 %v1520
    %1795 = vmatpush2.bf16.msra.mxu0 %v1519
    %1796 = vmatprep.subr.bf16.mxu0 %v1516
    %1797 = vmatpush2.bf16.msra.mxu0 %v1515
    %1798 = vmatprep.subr.bf16.mxu0 %v1512
    %1799 = vmatpush2.bf16.msra.mxu0 %v1511
    %1800 = vmatprep.subr.bf16.mxu0 %v1508
    %1801 = vmatpush2.bf16.msra.mxu0 %v1507
    %1802 = vmatprep.subr.bf16.mxu0 %v1504
    %1803 = vmatpush2.bf16.msra.mxu0 %v1503
    %1804 = vmatprep.subr.bf16.mxu0 %v1500
    %1805 = vmatpush2.bf16.msra.mxu0 %v1499
    %1806 = vmatprep.subr.bf16.mxu0 %v1496
    %1807 = vmatpush2.bf16.msra.mxu0 %v1495
    %1808 = vmatprep.mubr.bf16.mxu0 %v862
    %1809 = vmatmul.mubr.bf16.gmra.mxu0 %v861
    %v1810 = vpop.f32.mrf.mxu0
    %v1811 = vadd.f32 %v1770, %v1810
    %v1812 = vpop.f32.mrf.mxu0
    %v1813 = vadd.f32 %v1772, %v1812
    %v1814 = vpop.f32.mrf.mxu0
    %v1815 = vpop.f32.mrf.mxu0
    %1816 = vdwg.mxu0
    %v1817 = vmul.f32 %v1729, 0.2
    %v1818 = vmul.f32 %v1731, 0.2
    %v1819 = vmul.f32 %v1811, 0.2
    %v1820 = vmul.f32 %v1813, 0.2
    %v1821 = vmax.f32 %v1729, %v1817
    %v1822 = vmax.f32 %v1731, %v1818
    %v1823 = vmax.f32 %v1811, %v1819
    %v1824 = vmax.f32 %v1813, %v1820
    %v1825 = vpack.c.bf16 %v1821, %v1821
    %v1826 = vpack.c.bf16 %v1822, %v1822
    %v1827 = vpack.c.bf16 %v1823, %v1823
    %v1828 = vpack.c.bf16 %v1824, %v1824
    %v1829 = vld [vmem:[#allocation10] sm:$0xff]
    %v1830 = vld [vmem:[#allocation10 + $0x8] sm:$0xff]
    %v1831 = vld [vmem:[#allocation10 + $0x10] sm:$0xff]
    %v1832 = vld [vmem:[#allocation10 + $0x18] sm:$0xff]
    %v1833 = vld [vmem:[#allocation10 + $0x20] sm:$0xff]
    %v1834 = vld [vmem:[#allocation10 + $0x28] sm:$0xff]
    %v1835 = vld [vmem:[#allocation10 + $0x30] sm:$0xff]
    %v1836 = vld [vmem:[#allocation10 + $0x38] sm:$0xff]
    %v1837 = vld [vmem:[#allocation10 + $0x40] sm:$0xff]
    %v1838 = vld [vmem:[#allocation10 + $0x48] sm:$0xff]
    %v1839 = vld [vmem:[#allocation10 + $0x50] sm:$0xff]
    %v1840 = vld [vmem:[#allocation10 + $0x58] sm:$0xff]
    %v1841 = vld [vmem:[#allocation10 + $0x60] sm:$0xff]
    %v1842 = vld [vmem:[#allocation10 + $0x68] sm:$0xff]
    %v1843 = vld [vmem:[#allocation10 + $0x70] sm:$0xff]
    %v1844 = vld [vmem:[#allocation10 + $0x78] sm:$0xff]
    %v1845 = vld [vmem:[#allocation10 + $0x80] sm:$0xff]
    %v1846 = vld [vmem:[#allocation10 + $0x88] sm:$0xff]
    %v1847 = vld [vmem:[#allocation10 + $0x90] sm:$0xff]
    %v1848 = vld [vmem:[#allocation10 + $0x98] sm:$0xff]
    %v1849 = vld [vmem:[#allocation10 + $0xa0] sm:$0xff]
    %v1850 = vld [vmem:[#allocation10 + $0xa8] sm:$0xff]
    %v1851 = vld [vmem:[#allocation10 + $0xb0] sm:$0xff]
    %v1852 = vld [vmem:[#allocation10 + $0xb8] sm:$0xff]
    %v1853 = vld [vmem:[#allocation10 + $0xc0] sm:$0xff]
    %v1854 = vld [vmem:[#allocation10 + $0xc8] sm:$0xff]
    %v1855 = vld [vmem:[#allocation10 + $0xd0] sm:$0xff]
    %v1856 = vld [vmem:[#allocation10 + $0xd8] sm:$0xff]
    %v1857 = vld [vmem:[#allocation10 + $0xe0] sm:$0xff]
    %v1858 = vld [vmem:[#allocation10 + $0xe8] sm:$0xff]
    %v1859 = vld [vmem:[#allocation10 + $0xf0] sm:$0xff]
    %v1860 = vld [vmem:[#allocation10 + $0xf8] sm:$0xff]
    %v1861 = vld [vmem:[#allocation10 + $0x100] sm:$0xff]
    %v1862 = vld [vmem:[#allocation10 + $0x108] sm:$0xff]
    %v1863 = vld [vmem:[#allocation10 + $0x110] sm:$0xff]
    %v1864 = vld [vmem:[#allocation10 + $0x118] sm:$0xff]
    %v1865 = vld [vmem:[#allocation10 + $0x120] sm:$0xff]
    %v1866 = vld [vmem:[#allocation10 + $0x128] sm:$0xff]
    %v1867 = vld [vmem:[#allocation10 + $0x130] sm:$0xff]
    %v1868 = vld [vmem:[#allocation10 + $0x138] sm:$0xff]
    %v1869 = vld [vmem:[#allocation10 + $0x140] sm:$0xff]
    %v1870 = vld [vmem:[#allocation10 + $0x148] sm:$0xff]
    %v1871 = vld [vmem:[#allocation10 + $0x150] sm:$0xff]
    %v1872 = vld [vmem:[#allocation10 + $0x158] sm:$0xff]
    %v1873 = vld [vmem:[#allocation10 + $0x160] sm:$0xff]
    %v1874 = vld [vmem:[#allocation10 + $0x168] sm:$0xff]
    %v1875 = vld [vmem:[#allocation10 + $0x170] sm:$0xff]
    %v1876 = vld [vmem:[#allocation10 + $0x178] sm:$0xff]
    %v1877 = vld [vmem:[#allocation10 + $0x180] sm:$0xff]
    %v1878 = vld [vmem:[#allocation10 + $0x188] sm:$0xff]
    %v1879 = vld [vmem:[#allocation10 + $0x190] sm:$0xff]
    %v1880 = vld [vmem:[#allocation10 + $0x198] sm:$0xff]
    %v1881 = vld [vmem:[#allocation10 + $0x1a0] sm:$0xff]
    %v1882 = vld [vmem:[#allocation10 + $0x1a8] sm:$0xff]
    %v1883 = vld [vmem:[#allocation10 + $0x1b0] sm:$0xff]
    %v1884 = vld [vmem:[#allocation10 + $0x1b8] sm:$0xff]
    %v1885 = vld [vmem:[#allocation10 + $0x1c0] sm:$0xff]
    %v1886 = vld [vmem:[#allocation10 + $0x1c8] sm:$0xff]
    %v1887 = vld [vmem:[#allocation10 + $0x1d0] sm:$0xff]
    %v1888 = vld [vmem:[#allocation10 + $0x1d8] sm:$0xff]
    %v1889 = vld [vmem:[#allocation10 + $0x1e0] sm:$0xff]
    %v1890 = vld [vmem:[#allocation10 + $0x1e8] sm:$0xff]
    %v1891 = vld [vmem:[#allocation10 + $0x1f0] sm:$0xff]
    %v1892 = vld [vmem:[#allocation10 + $0x1f8] sm:$0xff]
    %v1893 = vld [vmem:[#allocation10 + $0x200] sm:$0xff]
    %v1894 = vld [vmem:[#allocation10 + $0x208] sm:$0xff]
    %v1895 = vld [vmem:[#allocation10 + $0x210] sm:$0xff]
    %v1896 = vld [vmem:[#allocation10 + $0x218] sm:$0xff]
    %v1897 = vld [vmem:[#allocation10 + $0x220] sm:$0xff]
    %v1898 = vld [vmem:[#allocation10 + $0x228] sm:$0xff]
    %v1899 = vld [vmem:[#allocation10 + $0x230] sm:$0xff]
    %v1900 = vld [vmem:[#allocation10 + $0x238] sm:$0xff]
    %v1901 = vld [vmem:[#allocation10 + $0x240] sm:$0xff]
    %v1902 = vld [vmem:[#allocation10 + $0x248] sm:$0xff]
    %v1903 = vld [vmem:[#allocation10 + $0x250] sm:$0xff]
    %v1904 = vld [vmem:[#allocation10 + $0x258] sm:$0xff]
    %v1905 = vld [vmem:[#allocation10 + $0x260] sm:$0xff]
    %v1906 = vld [vmem:[#allocation10 + $0x268] sm:$0xff]
    %v1907 = vld [vmem:[#allocation10 + $0x270] sm:$0xff]
    %v1908 = vld [vmem:[#allocation10 + $0x278] sm:$0xff]
    %v1909 = vld [vmem:[#allocation10 + $0x280] sm:$0xff]
    %v1910 = vld [vmem:[#allocation10 + $0x288] sm:$0xff]
    %v1911 = vld [vmem:[#allocation10 + $0x290] sm:$0xff]
    %v1912 = vld [vmem:[#allocation10 + $0x298] sm:$0xff]
    %v1913 = vld [vmem:[#allocation10 + $0x2a0] sm:$0xff]
    %v1914 = vld [vmem:[#allocation10 + $0x2a8] sm:$0xff]
    %v1915 = vld [vmem:[#allocation10 + $0x2b0] sm:$0xff]
    %v1916 = vld [vmem:[#allocation10 + $0x2b8] sm:$0xff]
    %v1917 = vld [vmem:[#allocation10 + $0x2c0] sm:$0xff]
    %v1918 = vld [vmem:[#allocation10 + $0x2c8] sm:$0xff]
    %v1919 = vld [vmem:[#allocation10 + $0x2d0] sm:$0xff]
    %v1920 = vld [vmem:[#allocation10 + $0x2d8] sm:$0xff]
    %v1921 = vld [vmem:[#allocation10 + $0x2e0] sm:$0xff]
    %v1922 = vld [vmem:[#allocation10 + $0x2e8] sm:$0xff]
    %v1923 = vld [vmem:[#allocation10 + $0x2f0] sm:$0xff]
    %v1924 = vld [vmem:[#allocation10 + $0x2f8] sm:$0xff]
    %v1925 = vld [vmem:[#allocation10 + $0x300] sm:$0xff]
    %v1926 = vld [vmem:[#allocation10 + $0x308] sm:$0xff]
    %v1927 = vld [vmem:[#allocation10 + $0x310] sm:$0xff]
    %v1928 = vld [vmem:[#allocation10 + $0x318] sm:$0xff]
    %v1929 = vld [vmem:[#allocation10 + $0x320] sm:$0xff]
    %v1930 = vld [vmem:[#allocation10 + $0x328] sm:$0xff]
    %v1931 = vld [vmem:[#allocation10 + $0x330] sm:$0xff]
    %v1932 = vld [vmem:[#allocation10 + $0x338] sm:$0xff]
    %v1933 = vld [vmem:[#allocation10 + $0x340] sm:$0xff]
    %v1934 = vld [vmem:[#allocation10 + $0x348] sm:$0xff]
    %v1935 = vld [vmem:[#allocation10 + $0x350] sm:$0xff]
    %v1936 = vld [vmem:[#allocation10 + $0x358] sm:$0xff]
    %v1937 = vld [vmem:[#allocation10 + $0x360] sm:$0xff]
    %v1938 = vld [vmem:[#allocation10 + $0x368] sm:$0xff]
    %v1939 = vld [vmem:[#allocation10 + $0x370] sm:$0xff]
    %v1940 = vld [vmem:[#allocation10 + $0x378] sm:$0xff]
    %v1941 = vld [vmem:[#allocation10 + $0x380] sm:$0xff]
    %v1942 = vld [vmem:[#allocation10 + $0x388] sm:$0xff]
    %v1943 = vld [vmem:[#allocation10 + $0x390] sm:$0xff]
    %v1944 = vld [vmem:[#allocation10 + $0x398] sm:$0xff]
    %v1945 = vld [vmem:[#allocation10 + $0x3a0] sm:$0xff]
    %v1946 = vld [vmem:[#allocation10 + $0x3a8] sm:$0xff]
    %v1947 = vld [vmem:[#allocation10 + $0x3b0] sm:$0xff]
    %v1948 = vld [vmem:[#allocation10 + $0x3b8] sm:$0xff]
    %v1949 = vld [vmem:[#allocation10 + $0x3c0] sm:$0xff]
    %v1950 = vld [vmem:[#allocation10 + $0x3c8] sm:$0xff]
    %v1951 = vld [vmem:[#allocation10 + $0x3d0] sm:$0xff]
    %v1952 = vld [vmem:[#allocation10 + $0x3d8] sm:$0xff]
    %v1953 = vld [vmem:[#allocation10 + $0x3e0] sm:$0xff]
    %v1954 = vld [vmem:[#allocation10 + $0x3e8] sm:$0xff]
    %v1955 = vld [vmem:[#allocation10 + $0x3f0] sm:$0xff]
    %v1956 = vld [vmem:[#allocation10 + $0x3f8] sm:$0xff]
    %s1957 = scalar_lea.vmem %s7, 1
    %v1958 = vld [vmem:[%s1957] ss:$4 sm:$0xf]
    %v1960 = vlaneseq
    %v1961 = vshrl.u32 %v1960, 7
    %v1962 = vsub.s32 0, %v1961
    %v1963 = vrot.slane %v1958, %v1962
    %v1964 = vlaneseq
    %v1965 = vshrl.u32 %v1964, 7
    %v1966 = vsub.s32 1, %v1965
    %v1967 = vrot.slane %v1958, %v1966
    %v1968 = vlaneseq
    %v1969 = vshrl.u32 %v1968, 7
    %v1970 = vsub.s32 2, %v1969
    %v1971 = vrot.slane %v1958, %v1970
    %v1972 = vlaneseq
    %v1973 = vshrl.u32 %v1972, 7
    %v1974 = vsub.s32 3, %v1973
    %v1975 = vrot.slane %v1958, %v1974
    %v2108 = vunpack.c.l.b16 %v1829
    %v2109 = vunpack.c.h.b16 %v1829
    %v2110 = vunpack.c.l.b16 %v1830
    %v2111 = vunpack.c.h.b16 %v1830
    %v2112 = vunpack.c.l.b16 %v1831
    %v2113 = vunpack.c.h.b16 %v1831
    %v2114 = vunpack.c.l.b16 %v1832
    %v2115 = vunpack.c.h.b16 %v1832
    %v2116 = vunpack.c.l.b16 %v1833
    %v2117 = vunpack.c.h.b16 %v1833
    %v2118 = vunpack.c.l.b16 %v1834
    %v2119 = vunpack.c.h.b16 %v1834
    %v2120 = vunpack.c.l.b16 %v1835
    %v2121 = vunpack.c.h.b16 %v1835
    %v2122 = vunpack.c.l.b16 %v1836
    %v2123 = vunpack.c.h.b16 %v1836
    %v2124 = vunpack.c.l.b16 %v1837
    %v2125 = vunpack.c.h.b16 %v1837
    %v2126 = vunpack.c.l.b16 %v1838
    %v2127 = vunpack.c.h.b16 %v1838
    %v2128 = vunpack.c.l.b16 %v1839
    %v2129 = vunpack.c.h.b16 %v1839
    %v2130 = vunpack.c.l.b16 %v1840
    %v2131 = vunpack.c.h.b16 %v1840
    %v2132 = vunpack.c.l.b16 %v1841
    %v2133 = vunpack.c.h.b16 %v1841
    %v2134 = vunpack.c.l.b16 %v1842
    %v2135 = vunpack.c.h.b16 %v1842
    %v2136 = vunpack.c.l.b16 %v1843
    %v2137 = vunpack.c.h.b16 %v1843
    %v2138 = vunpack.c.l.b16 %v1844
    %v2139 = vunpack.c.h.b16 %v1844
    %v2140 = vunpack.c.l.b16 %v1845
    %v2141 = vunpack.c.h.b16 %v1845
    %v2142 = vunpack.c.l.b16 %v1846
    %v2143 = vunpack.c.h.b16 %v1846
    %v2144 = vunpack.c.l.b16 %v1847
    %v2145 = vunpack.c.h.b16 %v1847
    %v2146 = vunpack.c.l.b16 %v1848
    %v2147 = vunpack.c.h.b16 %v1848
    %v2148 = vunpack.c.l.b16 %v1849
    %v2149 = vunpack.c.h.b16 %v1849
    %v2150 = vunpack.c.l.b16 %v1850
    %v2151 = vunpack.c.h.b16 %v1850
    %v2152 = vunpack.c.l.b16 %v1851
    %v2153 = vunpack.c.h.b16 %v1851
    %v2154 = vunpack.c.l.b16 %v1852
    %v2155 = vunpack.c.h.b16 %v1852
    %v2156 = vunpack.c.l.b16 %v1853
    %v2157 = vunpack.c.h.b16 %v1853
    %v2158 = vunpack.c.l.b16 %v1854
    %v2159 = vunpack.c.h.b16 %v1854
    %v2160 = vunpack.c.l.b16 %v1855
    %v2161 = vunpack.c.h.b16 %v1855
    %v2162 = vunpack.c.l.b16 %v1856
    %v2163 = vunpack.c.h.b16 %v1856
    %v2164 = vunpack.c.l.b16 %v1857
    %v2165 = vunpack.c.h.b16 %v1857
    %v2166 = vunpack.c.l.b16 %v1858
    %v2167 = vunpack.c.h.b16 %v1858
    %v2168 = vunpack.c.l.b16 %v1859
    %v2169 = vunpack.c.h.b16 %v1859
    %v2170 = vunpack.c.l.b16 %v1860
    %v2171 = vunpack.c.h.b16 %v1860
    %v2172 = vunpack.c.l.b16 %v1861
    %v2173 = vunpack.c.h.b16 %v1861
    %v2174 = vunpack.c.l.b16 %v1862
    %v2175 = vunpack.c.h.b16 %v1862
    %v2176 = vunpack.c.l.b16 %v1863
    %v2177 = vunpack.c.h.b16 %v1863
    %v2178 = vunpack.c.l.b16 %v1864
    %v2179 = vunpack.c.h.b16 %v1864
    %v2180 = vunpack.c.l.b16 %v1865
    %v2181 = vunpack.c.h.b16 %v1865
    %v2182 = vunpack.c.l.b16 %v1866
    %v2183 = vunpack.c.h.b16 %v1866
    %v2184 = vunpack.c.l.b16 %v1867
    %v2185 = vunpack.c.h.b16 %v1867
    %v2186 = vunpack.c.l.b16 %v1868
    %v2187 = vunpack.c.h.b16 %v1868
    %v2188 = vunpack.c.l.b16 %v1869
    %v2189 = vunpack.c.h.b16 %v1869
    %v2190 = vunpack.c.l.b16 %v1870
    %v2191 = vunpack.c.h.b16 %v1870
    %v2192 = vunpack.c.l.b16 %v1871
    %v2193 = vunpack.c.h.b16 %v1871
    %v2194 = vunpack.c.l.b16 %v1872
    %v2195 = vunpack.c.h.b16 %v1872
    %v2196 = vunpack.c.l.b16 %v1873
    %v2197 = vunpack.c.h.b16 %v1873
    %v2198 = vunpack.c.l.b16 %v1874
    %v2199 = vunpack.c.h.b16 %v1874
    %v2200 = vunpack.c.l.b16 %v1875
    %v2201 = vunpack.c.h.b16 %v1875
    %v2202 = vunpack.c.l.b16 %v1876
    %v2203 = vunpack.c.h.b16 %v1876
    %v2204 = vunpack.c.l.b16 %v1877
    %v2205 = vunpack.c.h.b16 %v1877
    %v2206 = vunpack.c.l.b16 %v1878
    %v2207 = vunpack.c.h.b16 %v1878
    %v2208 = vunpack.c.l.b16 %v1879
    %v2209 = vunpack.c.h.b16 %v1879
    %v2210 = vunpack.c.l.b16 %v1880
    %v2211 = vunpack.c.h.b16 %v1880
    %v2212 = vunpack.c.l.b16 %v1881
    %v2213 = vunpack.c.h.b16 %v1881
    %v2214 = vunpack.c.l.b16 %v1882
    %v2215 = vunpack.c.h.b16 %v1882
    %v2216 = vunpack.c.l.b16 %v1883
    %v2217 = vunpack.c.h.b16 %v1883
    %v2218 = vunpack.c.l.b16 %v1884
    %v2219 = vunpack.c.h.b16 %v1884
    %v2220 = vunpack.c.l.b16 %v1885
    %v2221 = vunpack.c.h.b16 %v1885
    %v2222 = vunpack.c.l.b16 %v1886
    %v2223 = vunpack.c.h.b16 %v1886
    %v2224 = vunpack.c.l.b16 %v1887
    %v2225 = vunpack.c.h.b16 %v1887
    %v2226 = vunpack.c.l.b16 %v1888
    %v2227 = vunpack.c.h.b16 %v1888
    %v2228 = vunpack.c.l.b16 %v1889
    %v2229 = vunpack.c.h.b16 %v1889
    %v2230 = vunpack.c.l.b16 %v1890
    %v2231 = vunpack.c.h.b16 %v1890
    %v2232 = vunpack.c.l.b16 %v1891
    %v2233 = vunpack.c.h.b16 %v1891
    %v2234 = vunpack.c.l.b16 %v1892
    %v2235 = vunpack.c.h.b16 %v1892
    %v2236 = vunpack.c.l.b16 %v1893
    %v2237 = vunpack.c.h.b16 %v1893
    %v2238 = vunpack.c.l.b16 %v1894
    %v2239 = vunpack.c.h.b16 %v1894
    %v2240 = vunpack.c.l.b16 %v1895
    %v2241 = vunpack.c.h.b16 %v1895
    %v2242 = vunpack.c.l.b16 %v1896
    %v2243 = vunpack.c.h.b16 %v1896
    %v2244 = vunpack.c.l.b16 %v1897
    %v2245 = vunpack.c.h.b16 %v1897
    %v2246 = vunpack.c.l.b16 %v1898
    %v2247 = vunpack.c.h.b16 %v1898
    %v2248 = vunpack.c.l.b16 %v1899
    %v2249 = vunpack.c.h.b16 %v1899
    %v2250 = vunpack.c.l.b16 %v1900
    %v2251 = vunpack.c.h.b16 %v1900
    %v2252 = vunpack.c.l.b16 %v1901
    %v2253 = vunpack.c.h.b16 %v1901
    %v2254 = vunpack.c.l.b16 %v1902
    %v2255 = vunpack.c.h.b16 %v1902
    %v2256 = vunpack.c.l.b16 %v1903
    %v2257 = vunpack.c.h.b16 %v1903
    %v2258 = vunpack.c.l.b16 %v1904
    %v2259 = vunpack.c.h.b16 %v1904
    %v2260 = vunpack.c.l.b16 %v1905
    %v2261 = vunpack.c.h.b16 %v1905
    %v2262 = vunpack.c.l.b16 %v1906
    %v2263 = vunpack.c.h.b16 %v1906
    %v2264 = vunpack.c.l.b16 %v1907
    %v2265 = vunpack.c.h.b16 %v1907
    %v2266 = vunpack.c.l.b16 %v1908
    %v2267 = vunpack.c.h.b16 %v1908
    %v2268 = vunpack.c.l.b16 %v1909
    %v2269 = vunpack.c.h.b16 %v1909
    %v2270 = vunpack.c.l.b16 %v1910
    %v2271 = vunpack.c.h.b16 %v1910
    %v2272 = vunpack.c.l.b16 %v1911
    %v2273 = vunpack.c.h.b16 %v1911
    %v2274 = vunpack.c.l.b16 %v1912
    %v2275 = vunpack.c.h.b16 %v1912
    %v2276 = vunpack.c.l.b16 %v1913
    %v2277 = vunpack.c.h.b16 %v1913
    %v2278 = vunpack.c.l.b16 %v1914
    %v2279 = vunpack.c.h.b16 %v1914
    %v2280 = vunpack.c.l.b16 %v1915
    %v2281 = vunpack.c.h.b16 %v1915
    %v2282 = vunpack.c.l.b16 %v1916
    %v2283 = vunpack.c.h.b16 %v1916
    %v2284 = vunpack.c.l.b16 %v1917
    %v2285 = vunpack.c.h.b16 %v1917
    %v2286 = vunpack.c.l.b16 %v1918
    %v2287 = vunpack.c.h.b16 %v1918
    %v2288 = vunpack.c.l.b16 %v1919
    %v2289 = vunpack.c.h.b16 %v1919
    %v2290 = vunpack.c.l.b16 %v1920
    %v2291 = vunpack.c.h.b16 %v1920
    %v2292 = vunpack.c.l.b16 %v1921
    %v2293 = vunpack.c.h.b16 %v1921
    %v2294 = vunpack.c.l.b16 %v1922
    %v2295 = vunpack.c.h.b16 %v1922
    %v2296 = vunpack.c.l.b16 %v1923
    %v2297 = vunpack.c.h.b16 %v1923
    %v2298 = vunpack.c.l.b16 %v1924
    %v2299 = vunpack.c.h.b16 %v1924
    %v2300 = vunpack.c.l.b16 %v1925
    %v2301 = vunpack.c.h.b16 %v1925
    %v2302 = vunpack.c.l.b16 %v1926
    %v2303 = vunpack.c.h.b16 %v1926
    %v2304 = vunpack.c.l.b16 %v1927
    %v2305 = vunpack.c.h.b16 %v1927
    %v2306 = vunpack.c.l.b16 %v1928
    %v2307 = vunpack.c.h.b16 %v1928
    %v2308 = vunpack.c.l.b16 %v1929
    %v2309 = vunpack.c.h.b16 %v1929
    %v2310 = vunpack.c.l.b16 %v1930
    %v2311 = vunpack.c.h.b16 %v1930
    %v2312 = vunpack.c.l.b16 %v1931
    %v2313 = vunpack.c.h.b16 %v1931
    %v2314 = vunpack.c.l.b16 %v1932
    %v2315 = vunpack.c.h.b16 %v1932
    %v2316 = vunpack.c.l.b16 %v1933
    %v2317 = vunpack.c.h.b16 %v1933
    %v2318 = vunpack.c.l.b16 %v1934
    %v2319 = vunpack.c.h.b16 %v1934
    %v2320 = vunpack.c.l.b16 %v1935
    %v2321 = vunpack.c.h.b16 %v1935
    %v2322 = vunpack.c.l.b16 %v1936
    %v2323 = vunpack.c.h.b16 %v1936
    %v2324 = vunpack.c.l.b16 %v1937
    %v2325 = vunpack.c.h.b16 %v1937
    %v2326 = vunpack.c.l.b16 %v1938
    %v2327 = vunpack.c.h.b16 %v1938
    %v2328 = vunpack.c.l.b16 %v1939
    %v2329 = vunpack.c.h.b16 %v1939
    %v2330 = vunpack.c.l.b16 %v1940
    %v2331 = vunpack.c.h.b16 %v1940
    %v2332 = vunpack.c.l.b16 %v1941
    %v2333 = vunpack.c.h.b16 %v1941
    %v2334 = vunpack.c.l.b16 %v1942
    %v2335 = vunpack.c.h.b16 %v1942
    %v2336 = vunpack.c.l.b16 %v1943
    %v2337 = vunpack.c.h.b16 %v1943
    %v2338 = vunpack.c.l.b16 %v1944
    %v2339 = vunpack.c.h.b16 %v1944
    %v2340 = vunpack.c.l.b16 %v1945
    %v2341 = vunpack.c.h.b16 %v1945
    %v2342 = vunpack.c.l.b16 %v1946
    %v2343 = vunpack.c.h.b16 %v1946
    %v2344 = vunpack.c.l.b16 %v1947
    %v2345 = vunpack.c.h.b16 %v1947
    %v2346 = vunpack.c.l.b16 %v1948
    %v2347 = vunpack.c.h.b16 %v1948
    %v2348 = vunpack.c.l.b16 %v1949
    %v2349 = vunpack.c.h.b16 %v1949
    %v2350 = vunpack.c.l.b16 %v1950
    %v2351 = vunpack.c.h.b16 %v1950
    %v2352 = vunpack.c.l.b16 %v1951
    %v2353 = vunpack.c.h.b16 %v1951
    %v2354 = vunpack.c.l.b16 %v1952
    %v2355 = vunpack.c.h.b16 %v1952
    %v2356 = vunpack.c.l.b16 %v1953
    %v2357 = vunpack.c.h.b16 %v1953
    %v2358 = vunpack.c.l.b16 %v1954
    %v2359 = vunpack.c.h.b16 %v1954
    %v2360 = vunpack.c.l.b16 %v1955
    %v2361 = vunpack.c.h.b16 %v1955
    %v2362 = vunpack.c.l.b16 %v1956
    %v2363 = vunpack.c.h.b16 %v1956
    %v2364 = vpack.c.b16 %v2112, %v2108
    %v2365 = vpack.c.b16 %v2113, %v2109
    %v2366 = vpack.c.b16 %v2114, %v2110
    %v2367 = vpack.c.b16 %v2115, %v2111
    %v2368 = vpack.c.b16 %v2120, %v2116
    %v2369 = vpack.c.b16 %v2121, %v2117
    %v2370 = vpack.c.b16 %v2122, %v2118
    %v2371 = vpack.c.b16 %v2123, %v2119
    %v2372 = vpack.c.b16 %v2128, %v2124
    %v2373 = vpack.c.b16 %v2129, %v2125
    %v2374 = vpack.c.b16 %v2130, %v2126
    %v2375 = vpack.c.b16 %v2131, %v2127
    %v2376 = vpack.c.b16 %v2136, %v2132
    %v2377 = vpack.c.b16 %v2137, %v2133
    %v2378 = vpack.c.b16 %v2138, %v2134
    %v2379 = vpack.c.b16 %v2139, %v2135
    %v2380 = vpack.c.b16 %v2144, %v2140
    %v2381 = vpack.c.b16 %v2145, %v2141
    %v2382 = vpack.c.b16 %v2146, %v2142
    %v2383 = vpack.c.b16 %v2147, %v2143
    %v2384 = vpack.c.b16 %v2152, %v2148
    %v2385 = vpack.c.b16 %v2153, %v2149
    %v2386 = vpack.c.b16 %v2154, %v2150
    %v2387 = vpack.c.b16 %v2155, %v2151
    %v2388 = vpack.c.b16 %v2160, %v2156
    %v2389 = vpack.c.b16 %v2161, %v2157
    %v2390 = vpack.c.b16 %v2162, %v2158
    %v2391 = vpack.c.b16 %v2163, %v2159
    %v2392 = vpack.c.b16 %v2168, %v2164
    %v2393 = vpack.c.b16 %v2169, %v2165
    %v2394 = vpack.c.b16 %v2170, %v2166
    %v2395 = vpack.c.b16 %v2171, %v2167
    %v2396 = vpack.c.b16 %v2176, %v2172
    %v2397 = vpack.c.b16 %v2177, %v2173
    %v2398 = vpack.c.b16 %v2178, %v2174
    %v2399 = vpack.c.b16 %v2179, %v2175
    %v2400 = vpack.c.b16 %v2184, %v2180
    %v2401 = vpack.c.b16 %v2185, %v2181
    %v2402 = vpack.c.b16 %v2186, %v2182
    %v2403 = vpack.c.b16 %v2187, %v2183
    %v2404 = vpack.c.b16 %v2192, %v2188
    %v2405 = vpack.c.b16 %v2193, %v2189
    %v2406 = vpack.c.b16 %v2194, %v2190
    %v2407 = vpack.c.b16 %v2195, %v2191
    %v2408 = vpack.c.b16 %v2200, %v2196
    %v2409 = vpack.c.b16 %v2201, %v2197
    %v2410 = vpack.c.b16 %v2202, %v2198
    %v2411 = vpack.c.b16 %v2203, %v2199
    %v2412 = vpack.c.b16 %v2208, %v2204
    %v2413 = vpack.c.b16 %v2209, %v2205
    %v2414 = vpack.c.b16 %v2210, %v2206
    %v2415 = vpack.c.b16 %v2211, %v2207
    %v2416 = vpack.c.b16 %v2216, %v2212
    %v2417 = vpack.c.b16 %v2217, %v2213
    %v2418 = vpack.c.b16 %v2218, %v2214
    %v2419 = vpack.c.b16 %v2219, %v2215
    %v2420 = vpack.c.b16 %v2224, %v2220
    %v2421 = vpack.c.b16 %v2225, %v2221
    %v2422 = vpack.c.b16 %v2226, %v2222
    %v2423 = vpack.c.b16 %v2227, %v2223
    %v2424 = vpack.c.b16 %v2232, %v2228
    %v2425 = vpack.c.b16 %v2233, %v2229
    %v2426 = vpack.c.b16 %v2234, %v2230
    %v2427 = vpack.c.b16 %v2235, %v2231
    %v2428 = vpack.c.b16 %v2240, %v2236
    %v2429 = vpack.c.b16 %v2241, %v2237
    %v2430 = vpack.c.b16 %v2242, %v2238
    %v2431 = vpack.c.b16 %v2243, %v2239
    %v2432 = vpack.c.b16 %v2248, %v2244
    %v2433 = vpack.c.b16 %v2249, %v2245
    %v2434 = vpack.c.b16 %v2250, %v2246
    %v2435 = vpack.c.b16 %v2251, %v2247
    %v2436 = vpack.c.b16 %v2256, %v2252
    %v2437 = vpack.c.b16 %v2257, %v2253
    %v2438 = vpack.c.b16 %v2258, %v2254
    %v2439 = vpack.c.b16 %v2259, %v2255
    %v2440 = vpack.c.b16 %v2264, %v2260
    %v2441 = vpack.c.b16 %v2265, %v2261
    %v2442 = vpack.c.b16 %v2266, %v2262
    %v2443 = vpack.c.b16 %v2267, %v2263
    %v2444 = vpack.c.b16 %v2272, %v2268
    %v2445 = vpack.c.b16 %v2273, %v2269
    %v2446 = vpack.c.b16 %v2274, %v2270
    %v2447 = vpack.c.b16 %v2275, %v2271
    %v2448 = vpack.c.b16 %v2280, %v2276
    %v2449 = vpack.c.b16 %v2281, %v2277
    %v2450 = vpack.c.b16 %v2282, %v2278
    %v2451 = vpack.c.b16 %v2283, %v2279
    %v2452 = vpack.c.b16 %v2288, %v2284
    %v2453 = vpack.c.b16 %v2289, %v2285
    %v2454 = vpack.c.b16 %v2290, %v2286
    %v2455 = vpack.c.b16 %v2291, %v2287
    %v2456 = vpack.c.b16 %v2296, %v2292
    %v2457 = vpack.c.b16 %v2297, %v2293
    %v2458 = vpack.c.b16 %v2298, %v2294
    %v2459 = vpack.c.b16 %v2299, %v2295
    %v2460 = vpack.c.b16 %v2304, %v2300
    %v2461 = vpack.c.b16 %v2305, %v2301
    %v2462 = vpack.c.b16 %v2306, %v2302
    %v2463 = vpack.c.b16 %v2307, %v2303
    %v2464 = vpack.c.b16 %v2312, %v2308
    %v2465 = vpack.c.b16 %v2313, %v2309
    %v2466 = vpack.c.b16 %v2314, %v2310
    %v2467 = vpack.c.b16 %v2315, %v2311
    %v2468 = vpack.c.b16 %v2320, %v2316
    %v2469 = vpack.c.b16 %v2321, %v2317
    %v2470 = vpack.c.b16 %v2322, %v2318
    %v2471 = vpack.c.b16 %v2323, %v2319
    %v2472 = vpack.c.b16 %v2328, %v2324
    %v2473 = vpack.c.b16 %v2329, %v2325
    %v2474 = vpack.c.b16 %v2330, %v2326
    %v2475 = vpack.c.b16 %v2331, %v2327
    %v2476 = vpack.c.b16 %v2336, %v2332
    %v2477 = vpack.c.b16 %v2337, %v2333
    %v2478 = vpack.c.b16 %v2338, %v2334
    %v2479 = vpack.c.b16 %v2339, %v2335
    %v2480 = vpack.c.b16 %v2344, %v2340
    %v2481 = vpack.c.b16 %v2345, %v2341
    %v2482 = vpack.c.b16 %v2346, %v2342
    %v2483 = vpack.c.b16 %v2347, %v2343
    %v2484 = vpack.c.b16 %v2352, %v2348
    %v2485 = vpack.c.b16 %v2353, %v2349
    %v2486 = vpack.c.b16 %v2354, %v2350
    %v2487 = vpack.c.b16 %v2355, %v2351
    %v2488 = vpack.c.b16 %v2360, %v2356
    %v2489 = vpack.c.b16 %v2361, %v2357
    %v2490 = vpack.c.b16 %v2362, %v2358
    %v2491 = vpack.c.b16 %v2363, %v2359
    %2620 = vmatprep.subr.bf16.mxu0 %v2393
    %2621 = vmatpush1.bf16.msra.mxu0 %v2392
    %2622 = vmatprep.subr.bf16.mxu0 %v2389
    %2623 = vmatpush1.bf16.msra.mxu0 %v2388
    %2624 = vmatprep.subr.bf16.mxu0 %v2385
    %2625 = vmatpush1.bf16.msra.mxu0 %v2384
    %2626 = vmatprep.subr.bf16.mxu0 %v2381
    %2627 = vmatpush1.bf16.msra.mxu0 %v2380
    %2628 = vmatprep.subr.bf16.mxu0 %v2377
    %2629 = vmatpush1.bf16.msra.mxu0 %v2376
    %2630 = vmatprep.subr.bf16.mxu0 %v2373
    %2631 = vmatpush1.bf16.msra.mxu0 %v2372
    %2632 = vmatprep.subr.bf16.mxu0 %v2369
    %2633 = vmatpush1.bf16.msra.mxu0 %v2368
    %2634 = vmatprep.subr.bf16.mxu0 %v2365
    %2635 = vmatpush1.bf16.msra.mxu0 %v2364
    %2636 = vmatprep.subr.bf16.mxu0 %v2425
    %2637 = vmatpush2.bf16.msra.mxu0 %v2424
    %2638 = vmatprep.subr.bf16.mxu0 %v2421
    %2639 = vmatpush2.bf16.msra.mxu0 %v2420
    %2640 = vmatprep.subr.bf16.mxu0 %v2417
    %2641 = vmatpush2.bf16.msra.mxu0 %v2416
    %2642 = vmatprep.subr.bf16.mxu0 %v2413
    %2643 = vmatpush2.bf16.msra.mxu0 %v2412
    %2644 = vmatprep.subr.bf16.mxu0 %v2409
    %2645 = vmatpush2.bf16.msra.mxu0 %v2408
    %2646 = vmatprep.subr.bf16.mxu0 %v2405
    %2647 = vmatpush2.bf16.msra.mxu0 %v2404
    %2648 = vmatprep.subr.bf16.mxu0 %v2401
    %2649 = vmatpush2.bf16.msra.mxu0 %v2400
    %2650 = vmatprep.subr.bf16.mxu0 %v2397
    %2651 = vmatpush2.bf16.msra.mxu0 %v2396
    %2652 = vmatprep.mubr.bf16.mxu0 %v1826
    %2653 = vmatmul.mubr.bf16.gmra.mxu0 %v1825
    %v2654 = vpop.f32.mrf.mxu0
    %v2655 = vadd.f32 %v1963, %v2654
    %v2656 = vpop.f32.mrf.mxu0
    %v2657 = vadd.f32 %v1967, %v2656
    %v2658 = vpop.f32.mrf.mxu0
    %v2659 = vpop.f32.mrf.mxu0
    %2660 = vdwg.mxu0
    %2661 = vmatprep.subr.bf16.mxu0 %v2457
    %2662 = vmatpush1.bf16.msra.mxu0 %v2456
    %2663 = vmatprep.subr.bf16.mxu0 %v2453
    %2664 = vmatpush1.bf16.msra.mxu0 %v2452
    %2665 = vmatprep.subr.bf16.mxu0 %v2449
    %2666 = vmatpush1.bf16.msra.mxu0 %v2448
    %2667 = vmatprep.subr.bf16.mxu0 %v2445
    %2668 = vmatpush1.bf16.msra.mxu0 %v2444
    %2669 = vmatprep.subr.bf16.mxu0 %v2441
    %2670 = vmatpush1.bf16.msra.mxu0 %v2440
    %2671 = vmatprep.subr.bf16.mxu0 %v2437
    %2672 = vmatpush1.bf16.msra.mxu0 %v2436
    %2673 = vmatprep.subr.bf16.mxu0 %v2433
    %2674 = vmatpush1.bf16.msra.mxu0 %v2432
    %2675 = vmatprep.subr.bf16.mxu0 %v2429
    %2676 = vmatpush1.bf16.msra.mxu0 %v2428
    %2677 = vmatprep.subr.bf16.mxu0 %v2489
    %2678 = vmatpush2.bf16.msra.mxu0 %v2488
    %2679 = vmatprep.subr.bf16.mxu0 %v2485
    %2680 = vmatpush2.bf16.msra.mxu0 %v2484
    %2681 = vmatprep.subr.bf16.mxu0 %v2481
    %2682 = vmatpush2.bf16.msra.mxu0 %v2480
    %2683 = vmatprep.subr.bf16.mxu0 %v2477
    %2684 = vmatpush2.bf16.msra.mxu0 %v2476
    %2685 = vmatprep.subr.bf16.mxu0 %v2473
    %2686 = vmatpush2.bf16.msra.mxu0 %v2472
    %2687 = vmatprep.subr.bf16.mxu0 %v2469
    %2688 = vmatpush2.bf16.msra.mxu0 %v2468
    %2689 = vmatprep.subr.bf16.mxu0 %v2465
    %2690 = vmatpush2.bf16.msra.mxu0 %v2464
    %2691 = vmatprep.subr.bf16.mxu0 %v2461
    %2692 = vmatpush2.bf16.msra.mxu0 %v2460
    %2693 = vmatprep.mubr.bf16.mxu0 %v1828
    %2694 = vmatmul.mubr.bf16.gmra.mxu0 %v1827
    %v2695 = vpop.f32.mrf.mxu0
    %v2696 = vadd.f32 %v2655, %v2695
    %v2697 = vpop.f32.mrf.mxu0
    %v2698 = vadd.f32 %v2657, %v2697
    %v2699 = vpop.f32.mrf.mxu0
    %v2700 = vpop.f32.mrf.mxu0
    %2701 = vdwg.mxu0
    %2702 = vmatprep.subr.bf16.mxu0 %v2395
    %2703 = vmatpush1.bf16.msra.mxu0 %v2394
    %2704 = vmatprep.subr.bf16.mxu0 %v2391
    %2705 = vmatpush1.bf16.msra.mxu0 %v2390
    %2706 = vmatprep.subr.bf16.mxu0 %v2387
    %2707 = vmatpush1.bf16.msra.mxu0 %v2386
    %2708 = vmatprep.subr.bf16.mxu0 %v2383
    %2709 = vmatpush1.bf16.msra.mxu0 %v2382
    %2710 = vmatprep.subr.bf16.mxu0 %v2379
    %2711 = vmatpush1.bf16.msra.mxu0 %v2378
    %2712 = vmatprep.subr.bf16.mxu0 %v2375
    %2713 = vmatpush1.bf16.msra.mxu0 %v2374
    %2714 = vmatprep.subr.bf16.mxu0 %v2371
    %2715 = vmatpush1.bf16.msra.mxu0 %v2370
    %2716 = vmatprep.subr.bf16.mxu0 %v2367
    %2717 = vmatpush1.bf16.msra.mxu0 %v2366
    %2718 = vmatprep.subr.bf16.mxu0 %v2427
    %2719 = vmatpush2.bf16.msra.mxu0 %v2426
    %2720 = vmatprep.subr.bf16.mxu0 %v2423
    %2721 = vmatpush2.bf16.msra.mxu0 %v2422
    %2722 = vmatprep.subr.bf16.mxu0 %v2419
    %2723 = vmatpush2.bf16.msra.mxu0 %v2418
    %2724 = vmatprep.subr.bf16.mxu0 %v2415
    %2725 = vmatpush2.bf16.msra.mxu0 %v2414
    %2726 = vmatprep.subr.bf16.mxu0 %v2411
    %2727 = vmatpush2.bf16.msra.mxu0 %v2410
    %2728 = vmatprep.subr.bf16.mxu0 %v2407
    %2729 = vmatpush2.bf16.msra.mxu0 %v2406
    %2730 = vmatprep.subr.bf16.mxu0 %v2403
    %2731 = vmatpush2.bf16.msra.mxu0 %v2402
    %2732 = vmatprep.subr.bf16.mxu0 %v2399
    %2733 = vmatpush2.bf16.msra.mxu0 %v2398
    %2734 = vmatprep.mubr.bf16.mxu0 %v1826
    %2735 = vmatmul.mubr.bf16.gmra.mxu0 %v1825
    %v2736 = vpop.f32.mrf.mxu0
    %v2737 = vadd.f32 %v1971, %v2736
    %v2738 = vpop.f32.mrf.mxu0
    %v2739 = vadd.f32 %v1975, %v2738
    %v2740 = vpop.f32.mrf.mxu0
    %v2741 = vpop.f32.mrf.mxu0
    %2742 = vdwg.mxu0
    %2743 = vmatprep.subr.bf16.mxu0 %v2459
    %2744 = vmatpush1.bf16.msra.mxu0 %v2458
    %2745 = vmatprep.subr.bf16.mxu0 %v2455
    %2746 = vmatpush1.bf16.msra.mxu0 %v2454
    %2747 = vmatprep.subr.bf16.mxu0 %v2451
    %2748 = vmatpush1.bf16.msra.mxu0 %v2450
    %2749 = vmatprep.subr.bf16.mxu0 %v2447
    %2750 = vmatpush1.bf16.msra.mxu0 %v2446
    %2751 = vmatprep.subr.bf16.mxu0 %v2443
    %2752 = vmatpush1.bf16.msra.mxu0 %v2442
    %2753 = vmatprep.subr.bf16.mxu0 %v2439
    %2754 = vmatpush1.bf16.msra.mxu0 %v2438
    %2755 = vmatprep.subr.bf16.mxu0 %v2435
    %2756 = vmatpush1.bf16.msra.mxu0 %v2434
    %2757 = vmatprep.subr.bf16.mxu0 %v2431
    %2758 = vmatpush1.bf16.msra.mxu0 %v2430
    %2759 = vmatprep.subr.bf16.mxu0 %v2491
    %2760 = vmatpush2.bf16.msra.mxu0 %v2490
    %2761 = vmatprep.subr.bf16.mxu0 %v2487
    %2762 = vmatpush2.bf16.msra.mxu0 %v2486
    %2763 = vmatprep.subr.bf16.mxu0 %v2483
    %2764 = vmatpush2.bf16.msra.mxu0 %v2482
    %2765 = vmatprep.subr.bf16.mxu0 %v2479
    %2766 = vmatpush2.bf16.msra.mxu0 %v2478
    %2767 = vmatprep.subr.bf16.mxu0 %v2475
    %2768 = vmatpush2.bf16.msra.mxu0 %v2474
    %2769 = vmatprep.subr.bf16.mxu0 %v2471
    %2770 = vmatpush2.bf16.msra.mxu0 %v2470
    %2771 = vmatprep.subr.bf16.mxu0 %v2467
    %2772 = vmatpush2.bf16.msra.mxu0 %v2466
    %2773 = vmatprep.subr.bf16.mxu0 %v2463
    %2774 = vmatpush2.bf16.msra.mxu0 %v2462
    %2775 = vmatprep.mubr.bf16.mxu0 %v1828
    %2776 = vmatmul.mubr.bf16.gmra.mxu0 %v1827
    %v2777 = vpop.f32.mrf.mxu0
    %v2778 = vadd.f32 %v2737, %v2777
    %v2779 = vpop.f32.mrf.mxu0
    %v2780 = vadd.f32 %v2739, %v2779
    %v2781 = vpop.f32.mrf.mxu0
    %v2782 = vpop.f32.mrf.mxu0
    %2783 = vdwg.mxu0
    %v2784 = vmul.f32 %v2696, 0.2
    %v2785 = vmul.f32 %v2698, 0.2
    %v2786 = vmul.f32 %v2778, 0.2
    %v2787 = vmul.f32 %v2780, 0.2
    %v2788 = vmax.f32 %v2696, %v2784
    %v2789 = vmax.f32 %v2698, %v2785
    %v2790 = vmax.f32 %v2778, %v2786
    %v2791 = vmax.f32 %v2780, %v2787
    %v2792 = vld [vmem:[%s6] sm:$0xf]
    %v2794 = vlaneseq
    %v2795 = vshrl.u32 %v2794, 7
    %v2796 = vsub.s32 0, %v2795
    %v2797 = vrot.slane %v2792, %v2796
    %v2798 = vlaneseq
    %v2799 = vshrl.u32 %v2798, 7
    %v2800 = vsub.s32 1, %v2799
    %v2801 = vrot.slane %v2792, %v2800
    %v2802 = vlaneseq
    %v2803 = vshrl.u32 %v2802, 7
    %v2804 = vsub.s32 2, %v2803
    %v2805 = vrot.slane %v2792, %v2804
    %v2806 = vlaneseq
    %v2807 = vshrl.u32 %v2806, 7
    %v2808 = vsub.s32 3, %v2807
    %v2809 = vrot.slane %v2792, %v2808
    %v2814 = vmul.f32 %v2788, %v2797
    %v2815 = vmul.f32 %v2789, %v2801
    %v2816 = vmul.f32 %v2790, %v2805
    %v2817 = vmul.f32 %v2791, %v2809
    %v2818 = vadd.f32 %v2814, %v2815
    %v2819 = vadd.f32 %v2818, %v2816
    %v2820 = vadd.f32 %v2819, %v2817
    %2821 = vadd.xlane.f32.xlu0 %v2820
    %v2822 = vpop.xlane.xlu0 %2821
    %v2823 = vld [vmem:[%s7 + $0x2] sm:$0x1]
    %v2824 = vlaneseq
    %v2825 = vshrl.u32 %v2824, 7
    %v2826 = vsub.s32 0, %v2825
    %v2827 = vrot.slane %v2823, %v2826
    %v2828 = vadd.f32 %v2822, %v2827
    %2829 = vxpose.xlu0.b32.start [1/16] %v2828, 128
    %2830 = vxpose.xlu0.b32.cont [2/16] 0.0, 128
    %2831 = vxpose.xlu0.b32.cont [3/16] 0.0, 128
    %2832 = vxpose.xlu0.b32.cont [4/16] 0.0, 128
    %2833 = vxpose.xlu0.b32.cont [5/16] 0.0, 128
    %2834 = vxpose.xlu0.b32.cont [6/16] 0.0, 128
    %2835 = vxpose.xlu0.b32.cont [7/16] 0.0, 128
    %2836 = vxpose.xlu0.b32.cont [8/16] 0.0, 128
    %2837 = vxpose.xlu0.b32.cont [9/16] 0.0, 128
    %2838 = vxpose.xlu0.b32.cont [10/16] 0.0, 128
    %2839 = vxpose.xlu0.b32.cont [11/16] 0.0, 128
    %2840 = vxpose.xlu0.b32.cont [12/16] 0.0, 128
    %2841 = vxpose.xlu0.b32.cont [13/16] 0.0, 128
    %2842 = vxpose.xlu0.b32.cont [14/16] 0.0, 128
    %2843 = vxpose.xlu0.b32.cont [15/16] 0.0, 128
    %2844 = vxpose.xlu0.b32.end [16/16] 0.0, 128
    %v2845 = vpop.trf.xlu0
    %v2846 = vpop.trf.xlu0
    %v2847 = vpop.trf.xlu0
    %v2848 = vpop.trf.xlu0
    %v2849 = vpop.trf.xlu0
    %v2850 = vpop.trf.xlu0
    %v2851 = vpop.trf.xlu0
    %v2852 = vpop.trf.xlu0
    %v2853 = vpop.trf.xlu0
    %v2854 = vpop.trf.xlu0
    %v2855 = vpop.trf.xlu0
    %v2856 = vpop.trf.xlu0
    %v2857 = vpop.trf.xlu0
    %v2858 = vpop.trf.xlu0
    %v2859 = vpop.trf.xlu0
    %v2860 = vpop.trf.xlu0
    %vm2861 = vcmask 57344
    %2862 = vst.msk [vmem:[#allocation11] sm:$0x1] %vm2861, %v2845
    // Predicated region
    $region54: #{tpu_custom_call.1} parent=1 // pred_check
      _
    $region55: #{tpu_custom_call.1} parent=1 // pred_check_branch
      %2864 = sbr.rel (0) target = $region57
    $region56: #{tpu_custom_call.1} parent=1 // pred_region
      %s2866 = ssub.s32 16, 16
      %2867 = vsyncadd [#allocation4], %s2866
      %s2869 = sshll.u32 [#allocation11], 4
      %s2870 = int_to_ptr.vmem [resolvable:$true] %s2869
      %2872 = dma.vmem_to_hbm [thread:$0]  %s2870, 16, %s8, [#allocation4]
    $region57: #{tpu_custom_call.1} parent=1 // pred_fallthru
      _
    // Predicated region
    $region58: #{tpu_custom_call.1} parent=1 // pred_check
      _
    $region59: #{tpu_custom_call.1} parent=1 // pred_check_branch
      %2874 = sbr.rel (0) target = $region61
    $region60: #{tpu_custom_call.1} parent=1 // pred_region
      %2875 = dma.done [#allocation4], 16
    $region61: #{tpu_custom_call.1} parent=1 // pred_fallthru
      _
    %2876 = vsyncpa [#allocation3], 1
    %2877 = vsyncpa [#allocation6], 1
    %2878 = vsyncpa [#allocation9], 1
    %2879 = vsyncpa [#allocation4], 1

</llo_original>
